<compile_context>
chip_gen: v6e
topology: v6e:2x2x1
jax: 0.10.0
libtpu: 0.0.40
codegen_flags: <defaults>
</compile_context>

<pallas_src>
import math

import jax
import jax.numpy as jnp
import numpy as np
from jax.experimental import pallas as pl
from jax.experimental.pallas import tpu as pltpu

# ---------------- config (small, consistent with the module) ----------------
B, T = 2, 8
C = 64                    # n_embd
N_HEAD = 4
HS = C // N_HEAD          # head size
HH = HS // 2              # rope pair count per head
A_T = 10                  # adapter_prompt_length
EPS = 1e-5                # RMSNorm eps
BT = B * T


def find_multiple(n: int, k: int) -> int:
    return n if n % k == 0 else n + k - (n % k)


H_MLP = find_multiple(int(2 * (4 * C) / 3), 256)   # lit-llama MLP hidden dim


# ------------------------------- kernel -------------------------------------
def _softmax(s):
    m = jnp.max(s, axis=-1, keepdims=True)
    e = jnp.exp(s - m)
    # EUP reciprocal instead of a VALU divide.
    return e * pl.reciprocal(jnp.sum(e, axis=-1, keepdims=True), approx=True)


def _dot_t(a, b):
    # a @ b.T contracting the last dim of both operands; f32 MXU accumulation.
    return jax.lax.dot_general(a, b, (((1,), (1,)), ((), ())),
                               preferred_element_type=jnp.float32)


def block_kernel(gate_ref,            # SMEM (1,)        adapter gating factor
                 x_ref,               # (B*T, C) f32     fused-batch activations
                 g1_ref, g2_ref,      # (1, C)   f32     RMSNorm scales
                 wqkv_ref,            # (C, 3C)  bf16    c_attn^T (q/k cols permuted, q pre-scaled)
                 wproj_ref,           # (C, C)   bf16    c_proj^T
                 akv_ref,             # (A_T, 2C) bf16   adapter [k | v] projection (hoisted)
                 cos_ref, sin_ref,    # (B*T, C//2) f32  rope cache tiled to all heads / batches
                 bias_ref,            # (B*T, B*T) f32   0 / -1e30 same-batch causal bias
                 w1_ref, w2_ref,      # (C, H_MLP) bf16  MLP c_fc1^T, c_fc2^T
                 w3_ref,              # (H_MLP, C) bf16  MLP c_proj^T
                 o_ref):              # (B*T, C) f32     output slab
    x = x_ref[...]                                             # (BT, C)

    # ---- RMSNorm 1 (f32) ----
    xn = x * jax.lax.rsqrt(jnp.mean(x * x, axis=-1, keepdims=True) + EPS) * g1_ref[...]

    # ---- fused qkv projection on the whole (B*T, C) slab ----
    qkv = jnp.dot(xn.astype(jnp.bfloat16), wqkv_ref[...],
                  preferred_element_type=jnp.float32)          # (BT, 3C)

    H2 = C // 2
    cos = cos_ref[...]
    sin = sin_ref[...]
    q1, q2 = qkv[:, :H2], qkv[:, H2:C]
    k1, k2 = qkv[:, C:C + H2], qkv[:, C + H2:2 * C]
    v = qkv[:, 2 * C:]

    # ---- RoPE for all heads at once (two whole-slab rotations, f32) ----
    qr1 = (q1 * cos - q2 * sin).astype(jnp.bfloat16)
    qr2 = (q2 * cos + q1 * sin).astype(jnp.bfloat16)
    kr1 = (k1 * cos - k2 * sin).astype(jnp.bfloat16)
    kr2 = (k2 * cos + k1 * sin).astype(jnp.bfloat16)
    vb = v.astype(jnp.bfloat16)

    bias = bias_ref[...]                                       # (BT, BT)
    gate = gate_ref[0]
    ak = akv_ref[:, :C]                                        # (A_T, C) [evens|odds]
    av = akv_ref[:, C:]                                        # (A_T, C) per-head layout

    ys = []
    for h in range(N_HEAD):                                    # static, small loop
        p = slice(h * HH, (h + 1) * HH)                        # pair slice in each half
        d = slice(h * HS, (h + 1) * HS)                        # head slice in v / av

        # causal self-attention over the fused batch rows (bias is block-diag + causal;
        # score scale already folded into the q weights)
        s = _dot_t(qr1[:, p], kr1[:, p]) + _dot_t(qr2[:, p], kr2[:, p]) + bias
        y = jnp.dot(_softmax(s).astype(jnp.bfloat16), vb[:, d],
                    preferred_element_type=jnp.float32)        # (BT, HS)

        # adapter prompt attention (unmasked, keys not roped)
        sa = (_dot_t(qr1[:, p], ak[:, p])
              + _dot_t(qr2[:, p], ak[:, H2 + h * HH:H2 + (h + 1) * HH]))
        ya = jnp.dot(_softmax(sa).astype(jnp.bfloat16), av[:, d],
                     preferred_element_type=jnp.float32)       # (BT, HS)

        ys.append(y + gate * ya)

    # one full-width output projection instead of N_HEAD partial ones
    y_all = jnp.concatenate(ys, axis=-1)                       # (BT, C)
    attn_out = jnp.dot(y_all.astype(jnp.bfloat16), wproj_ref[...],
                       preferred_element_type=jnp.float32)
    h1 = x + attn_out

    # ---- RMSNorm 2 + SwiGLU MLP ----
    hn = h1 * jax.lax.rsqrt(jnp.mean(h1 * h1, axis=-1, keepdims=True) + EPS) * g2_ref[...]
    hb = hn.astype(jnp.bfloat16)
    a1 = jnp.dot(hb, w1_ref[...], preferred_element_type=jnp.float32)
    a2 = jnp.dot(hb, w2_ref[...], preferred_element_type=jnp.float32)
    glu = (a1 * jax.nn.sigmoid(a1)) * a2                       # f32 elementwise
    mlp = jnp.dot(glu.astype(jnp.bfloat16), w3_ref[...],
                  preferred_element_type=jnp.float32)

    o_ref[...] = (h1 + mlp).astype(o_ref.dtype)


# ------------------------------ wrapper -------------------------------------
def adapter_block(x, gate, g1, g2, W_attn, W_proj, prefix, cos_half, sin_half,
                  W1, W2, W3):
    # --- offline-style weight prep (outside the kernel) ---
    # permute q/k output channels to [all-head evens | all-head odds] so RoPE is
    # two whole-slab rotations; fold the 1/sqrt(HS) score scale into q.
    evens = np.concatenate([h * HS + np.arange(0, HS, 2) for h in range(N_HEAD)])
    odds = np.concatenate([h * HS + np.arange(1, HS, 2) for h in range(N_HEAD)])
    qk_perm = np.concatenate([evens, odds])
    full_perm = np.concatenate([qk_perm, C + qk_perm, 2 * C + np.arange(C)])
    W_attn_p = W_attn[jnp.asarray(full_perm)]                       # (3C, C)
    W_attn_p = W_attn_p.at[:C, :].multiply(1.0 / math.sqrt(HS))     # scale q rows

    wqkv_t = W_attn_p.T.astype(jnp.bfloat16)                        # (C, 3C)
    wproj_t = W_proj.T.astype(jnp.bfloat16)                         # (C, C)
    w1_t = W1.T.astype(jnp.bfloat16)                                # (C, H_MLP)
    w2_t = W2.T.astype(jnp.bfloat16)
    w3_t = W3.T.astype(jnp.bfloat16)                                # (H_MLP, C)

    # batch-invariant adapter projection hoisted out of the kernel (k/v only)
    akv = (prefix @ W_attn_p[C:].T).astype(jnp.bfloat16)            # (A_T, 2C)

    # rope cache tiled once to the fused (B*T, N_HEAD*HS/2) layout
    cos_t = jnp.tile(cos_half, (B, N_HEAD)).astype(jnp.float32)     # (BT, C//2)
    sin_t = jnp.tile(sin_half, (B, N_HEAD)).astype(jnp.float32)

    # batch-invariant block-diagonal + causal additive bias (hoisted)
    pos = np.arange(BT)
    ok = ((pos[:, None] // T) == (pos[None, :] // T)) & \
         ((pos[None, :] % T) <= (pos[:, None] % T))
    bias = jnp.where(jnp.asarray(ok), 0.0, -1e30).astype(jnp.float32)  # (BT, BT)

    vmem = pl.BlockSpec(memory_space=pltpu.MemorySpace.VMEM)
    out2d = pl.pallas_call(
        block_kernel,
        out_shape=jax.ShapeDtypeStruct((BT, C), jnp.float32),
        in_specs=[pl.BlockSpec(memory_space=pltpu.MemorySpace.SMEM)] + [vmem] * 12,
        out_specs=vmem,
    )(gate, x.reshape(BT, C), g1[None, :], g2[None, :], wqkv_t, wproj_t,
      akv, cos_t, sin_t, bias, w1_t, w2_t, w3_t)
    return out2d.reshape(B, T, C)


# --------------------- pure-JAX reference (PyTorch semantics) ----------------
def reference(x, gate, g1, g2, W_attn, W_proj, prefix, cos_half, sin_half, W1, W2, W3):
    def rms(v, g):
        return v * jax.lax.rsqrt(jnp.mean(v * v, axis=-1, keepdims=True) + EPS) * g

    xn = rms(x, g1)
    qkv = xn @ W_attn.T                                        # (B, T, 3C)
    q, k, v = jnp.split(qkv, 3, axis=-1)
    to_heads = lambda t: t.reshape(B, T, N_HEAD, HS).transpose(0, 2, 1, 3)
    q, k, v = map(to_heads, (q, k, v))

    def apply_rope(t):                                         # interleaved rope
        tr = t.reshape(B, N_HEAD, T, HS // 2, 2)
        t1, t2 = tr[..., 0], tr[..., 1]
        c, s = cos_half[None, None], sin_half[None, None]
        return jnp.stack([t1 * c - t2 * s, t2 * c + t1 * s], -1).reshape(B, N_HEAD, T, HS)

    q, k = apply_rope(q), apply_rope(k)
    scale = 1.0 / math.sqrt(HS)
    att = jnp.einsum('bhqd,bhkd->bhqk', q, k) * scale
    att = jnp.where(jnp.tril(jnp.ones((T, T), bool)), att, -jnp.inf)
    y = jnp.einsum('bhqk,bhkd->bhqd', jax.nn.softmax(att, -1), v)

    a_qkv = prefix @ W_attn.T                                  # (A_T, 3C)
    ak = a_qkv[:, C:2 * C].reshape(A_T, N_HEAD, HS).transpose(1, 0, 2)
    av = a_qkv[:, 2 * C:].reshape(A_T, N_HEAD, HS).transpose(1, 0, 2)
    sa = jnp.einsum('bhqd,hkd->bhqk', q, ak) * scale
    ya = jnp.einsum('bhqk,hkd->bhqd', jax.nn.softmax(sa, -1), av)
    y = y + gate[0] * ya

    y = y.transpose(0, 2, 1, 3).reshape(B, T, C) @ W_proj.T
    h = x + y
    hn = rms(h, g2)
    return h + (jax.nn.silu(hn @ W1.T) * (hn @ W2.T)) @ W3.T


# --------------------------------- main --------------------------------------
if __name__ == "__main__":
    keys = jax.random.split(jax.random.PRNGKey(0), 8)
    init = lambda k, shape: 0.02 * jax.random.normal(k, shape, jnp.float32)

    W_attn = init(keys[0], (3 * C, C))          # c_attn.weight
    W_proj = init(keys[1], (C, C))              # c_proj.weight
    prefix = init(keys[2], (A_T, C))            # adapter_wte.weight
    W1 = init(keys[3], (H_MLP, C))              # mlp.c_fc1.weight
    W2 = init(keys[4], (H_MLP, C))              # mlp.c_fc2.weight
    W3 = init(keys[5], (C, H_MLP))              # mlp.c_proj.weight
    g1 = jnp.ones((C,), jnp.float32)            # rms_1.scale
    g2 = jnp.ones((C,), jnp.float32)            # rms_2.scale
    # module inits gating_factor to 0; use a nonzero value so the adapter path is exercised
    gate = jnp.array([0.25], jnp.float32)

    x = jax.random.normal(keys[6], (B, T, C), jnp.float32)

    # rope cache (lit-llama build_rope_cache)
    theta = 1.0 / (10000.0 ** (jnp.arange(0, HS, 2, dtype=jnp.float32) / HS))
    idx = jnp.outer(jnp.arange(T, dtype=jnp.float32), theta)   # (T, HS//2)
    cos_half, sin_half = jnp.cos(idx), jnp.sin(idx)

    out = adapter_block(x, gate, g1, g2, W_attn, W_proj, prefix,
                        cos_half, sin_half, W1, W2, W3)
    out = jax.block_until_ready(out)

    ref = reference(x, gate, g1, g2, W_attn, W_proj, prefix, cos_half, sin_half,
                    W1, W2, W3)
    assert out.shape == (B, T, C)
    # bf16 matmul inputs + approx reciprocal -> looser tolerance than the f32 kernel
    assert jnp.allclose(out, ref, atol=1e-2, rtol=1e-2), \
        f"max abs err = {float(jnp.max(jnp.abs(out - ref)))}"

    print("KERNEL_OK")
</pallas_src>

<mosaic_0001>
module attributes {stable_mosaic.version = 11 : i64} {
  func.func @block_kernel(%arg0: memref<1xf32, #tpu.memory_space<smem>>, %arg1: memref<16x64xf32, #tpu.memory_space<vmem>>, %arg2: memref<1x64xf32, #tpu.memory_space<vmem>>, %arg3: memref<1x64xf32, #tpu.memory_space<vmem>>, %arg4: memref<64x192xbf16, #tpu.memory_space<vmem>>, %arg5: memref<64x64xbf16, #tpu.memory_space<vmem>>, %arg6: memref<10x128xbf16, #tpu.memory_space<vmem>>, %arg7: memref<16x32xf32, #tpu.memory_space<vmem>>, %arg8: memref<16x32xf32, #tpu.memory_space<vmem>>, %arg9: memref<16x16xf32, #tpu.memory_space<vmem>>, %arg10: memref<64x256xbf16, #tpu.memory_space<vmem>>, %arg11: memref<64x256xbf16, #tpu.memory_space<vmem>>, %arg12: memref<256x64xbf16, #tpu.memory_space<vmem>>, %arg13: memref<16x64xf32, #tpu.memory_space<vmem>>) attributes {dimension_semantics = [], scalar_prefetch = 0 : i64, scratch_operands = 0 : i64, tpu.core_type = #tpu.core_type<tc>} {
    %c0 = arith.constant 0 : index
    %c0_0 = arith.constant 0 : index
    %0 = vector.load %arg1[%c0, %c0_0] : memref<16x64xf32, #tpu.memory_space<vmem>>, vector<16x64xf32>
    %1 = arith.mulf %0, %0 : vector<16x64xf32>
    %cst = arith.constant dense<0.000000e+00> : vector<16xf32>
    %2 = vector.multi_reduction <add>, %1, %cst [1] : vector<16x64xf32> to vector<16xf32>
    %3 = vector.shape_cast %2 : vector<16xf32> to vector<16x1xf32>
    %cst_1 = arith.constant 6.400000e+01 : f32
    %4 = vector.broadcast %cst_1 : f32 to vector<16x1xf32>
    %5 = arith.divf %3, %4 : vector<16x1xf32>
    %cst_2 = arith.constant 9.99999974E-6 : f32
    %6 = vector.broadcast %cst_2 : f32 to vector<16x1xf32>
    %7 = arith.addf %5, %6 : vector<16x1xf32>
    %8 = math.rsqrt %7 : vector<16x1xf32>
    %9 = vector.broadcast %8 : vector<16x1xf32> to vector<16x64xf32>
    %10 = arith.mulf %0, %9 : vector<16x64xf32>
    %c0_3 = arith.constant 0 : index
    %c0_4 = arith.constant 0 : index
    %11 = vector.load %arg2[%c0_3, %c0_4] : memref<1x64xf32, #tpu.memory_space<vmem>>, vector<1x64xf32>
    %12 = vector.broadcast %11 : vector<1x64xf32> to vector<16x64xf32>
    %13 = arith.mulf %10, %12 : vector<16x64xf32>
    %14 = arith.truncf %13 : vector<16x64xf32> to vector<16x64xbf16>
    %c0_5 = arith.constant 0 : index
    %c0_6 = arith.constant 0 : index
    %15 = vector.load %arg4[%c0_5, %c0_6] : memref<64x192xbf16, #tpu.memory_space<vmem>>, vector<64x192xbf16>
    %cst_7 = arith.constant dense<0.000000e+00> : vector<16x192xf32>
    %16 = tpu.matmul %14, %15, %cst_7 {dimension_numbers = #tpu.dot_dimension_numbers<[1], [0], [0], [1], [0, 0, 1, 1], [], []>} : vector<16x64xbf16>, vector<64x192xbf16>, vector<16x192xf32> -> vector<16x192xf32>
    %c0_8 = arith.constant 0 : index
    %c0_9 = arith.constant 0 : index
    %17 = vector.load %arg7[%c0_8, %c0_9] : memref<16x32xf32, #tpu.memory_space<vmem>>, vector<16x32xf32>
    %c0_10 = arith.constant 0 : index
    %c0_11 = arith.constant 0 : index
    %18 = vector.load %arg8[%c0_10, %c0_11] : memref<16x32xf32, #tpu.memory_space<vmem>>, vector<16x32xf32>
    %19 = vector.extract_strided_slice %16 {offsets = [0, 0], sizes = [16, 32], strides = [1, 1]} : vector<16x192xf32> to vector<16x32xf32>
    %20 = vector.extract_strided_slice %16 {offsets = [0, 32], sizes = [16, 32], strides = [1, 1]} : vector<16x192xf32> to vector<16x32xf32>
    %21 = vector.extract_strided_slice %16 {offsets = [0, 64], sizes = [16, 32], strides = [1, 1]} : vector<16x192xf32> to vector<16x32xf32>
    %22 = vector.extract_strided_slice %16 {offsets = [0, 96], sizes = [16, 32], strides = [1, 1]} : vector<16x192xf32> to vector<16x32xf32>
    %23 = vector.extract_strided_slice %16 {offsets = [0, 128], sizes = [16, 64], strides = [1, 1]} : vector<16x192xf32> to vector<16x64xf32>
    %24 = arith.mulf %19, %17 : vector<16x32xf32>
    %25 = arith.mulf %20, %18 : vector<16x32xf32>
    %26 = arith.subf %24, %25 : vector<16x32xf32>
    %27 = arith.truncf %26 : vector<16x32xf32> to vector<16x32xbf16>
    %28 = arith.mulf %20, %17 : vector<16x32xf32>
    %29 = arith.mulf %19, %18 : vector<16x32xf32>
    %30 = arith.addf %28, %29 : vector<16x32xf32>
    %31 = arith.truncf %30 : vector<16x32xf32> to vector<16x32xbf16>
    %32 = arith.mulf %21, %17 : vector<16x32xf32>
    %33 = arith.mulf %22, %18 : vector<16x32xf32>
    %34 = arith.subf %32, %33 : vector<16x32xf32>
    %35 = arith.truncf %34 : vector<16x32xf32> to vector<16x32xbf16>
    %36 = arith.mulf %22, %17 : vector<16x32xf32>
    %37 = arith.mulf %21, %18 : vector<16x32xf32>
    %38 = arith.addf %36, %37 : vector<16x32xf32>
    %39 = arith.truncf %38 : vector<16x32xf32> to vector<16x32xbf16>
    %40 = arith.truncf %23 : vector<16x64xf32> to vector<16x64xbf16>
    %c0_12 = arith.constant 0 : index
    %c0_13 = arith.constant 0 : index
    %41 = vector.load %arg9[%c0_12, %c0_13] : memref<16x16xf32, #tpu.memory_space<vmem>>, vector<16x16xf32>
    %c0_14 = arith.constant 0 : index
    %42 = memref.load %arg0[%c0_14] : memref<1xf32, #tpu.memory_space<smem>>
    %c0_15 = arith.constant 0 : index
    %c0_16 = arith.constant 0 : index
    %43 = vector.load %arg6[%c0_15, %c0_16] : memref<10x128xbf16, #tpu.memory_space<vmem>>, vector<10x64xbf16>
    %c0_17 = arith.constant 0 : index
    %c64 = arith.constant 64 : index
    %44 = vector.load %arg6[%c0_17, %c64] : memref<10x128xbf16, #tpu.memory_space<vmem>>, vector<10x64xbf16>
    %45 = vector.extract_strided_slice %27 {offsets = [0, 0], sizes = [16, 8], strides = [1, 1]} : vector<16x32xbf16> to vector<16x8xbf16>
    %46 = vector.extract_strided_slice %35 {offsets = [0, 0], sizes = [16, 8], strides = [1, 1]} : vector<16x32xbf16> to vector<16x8xbf16>
    %cst_18 = arith.constant dense<0.000000e+00> : vector<16x16xf32>
    %47 = tpu.matmul %45, %46, %cst_18 {dimension_numbers = #tpu.dot_dimension_numbers<[1], [1], [0], [0], [0, 0, 1, 0], [], []>} : vector<16x8xbf16>, vector<16x8xbf16>, vector<16x16xf32> -> vector<16x16xf32>
    %48 = vector.extract_strided_slice %31 {offsets = [0, 0], sizes = [16, 8], strides = [1, 1]} : vector<16x32xbf16> to vector<16x8xbf16>
    %49 = vector.extract_strided_slice %39 {offsets = [0, 0], sizes = [16, 8], strides = [1, 1]} : vector<16x32xbf16> to vector<16x8xbf16>
    %cst_19 = arith.constant dense<0.000000e+00> : vector<16x16xf32>
    %50 = tpu.matmul %48, %49, %cst_19 {dimension_numbers = #tpu.dot_dimension_numbers<[1], [1], [0], [0], [0, 0, 1, 0], [], []>} : vector<16x8xbf16>, vector<16x8xbf16>, vector<16x16xf32> -> vector<16x16xf32>
    %51 = arith.addf %47, %50 : vector<16x16xf32>
    %52 = arith.addf %51, %41 : vector<16x16xf32>
    %cst_20 = arith.constant dense<0xFF800000> : vector<16xf32>
    %53 = vector.multi_reduction <maximumf>, %52, %cst_20 [1] : vector<16x16xf32> to vector<16xf32>
    %54 = vector.shape_cast %53 : vector<16xf32> to vector<16x1xf32>
    %55 = vector.broadcast %54 : vector<16x1xf32> to vector<16x16xf32>
    %56 = arith.subf %52, %55 : vector<16x16xf32>
    %57 = math.exp %56 : vector<16x16xf32>
    %cst_21 = arith.constant dense<0.000000e+00> : vector<16xf32>
    %58 = vector.multi_reduction <add>, %57, %cst_21 [1] : vector<16x16xf32> to vector<16xf32>
    %59 = vector.shape_cast %58 : vector<16xf32> to vector<16x1xf32>
    %60 = tpu.reciprocal %59 {approx = true} : vector<16x1xf32> -> vector<16x1xf32>
    %61 = vector.broadcast %60 : vector<16x1xf32> to vector<16x16xf32>
    %62 = arith.mulf %57, %61 : vector<16x16xf32>
    %63 = arith.truncf %62 : vector<16x16xf32> to vector<16x16xbf16>
    %64 = vector.extract_strided_slice %40 {offsets = [0, 0], sizes = [16, 16], strides = [1, 1]} : vector<16x64xbf16> to vector<16x16xbf16>
    %cst_22 = arith.constant dense<0.000000e+00> : vector<16x16xf32>
    %65 = tpu.matmul %63, %64, %cst_22 {dimension_numbers = #tpu.dot_dimension_numbers<[1], [0], [0], [1], [0, 0, 1, 1], [], []>} : vector<16x16xbf16>, vector<16x16xbf16>, vector<16x16xf32> -> vector<16x16xf32>
    %66 = vector.extract_strided_slice %27 {offsets = [0, 0], sizes = [16, 8], strides = [1, 1]} : vector<16x32xbf16> to vector<16x8xbf16>
    %67 = vector.extract_strided_slice %43 {offsets = [0, 0], sizes = [10, 8], strides = [1, 1]} : vector<10x64xbf16> to vector<10x8xbf16>
    %cst_23 = arith.constant dense<0.000000e+00> : vector<16x10xf32>
    %68 = tpu.matmul %66, %67, %cst_23 {dimension_numbers = #tpu.dot_dimension_numbers<[1], [1], [0], [0], [0, 0, 1, 0], [], []>} : vector<16x8xbf16>, vector<10x8xbf16>, vector<16x10xf32> -> vector<16x10xf32>
    %69 = vector.extract_strided_slice %31 {offsets = [0, 0], sizes = [16, 8], strides = [1, 1]} : vector<16x32xbf16> to vector<16x8xbf16>
    %70 = vector.extract_strided_slice %43 {offsets = [0, 32], sizes = [10, 8], strides = [1, 1]} : vector<10x64xbf16> to vector<10x8xbf16>
    %cst_24 = arith.constant dense<0.000000e+00> : vector<16x10xf32>
    %71 = tpu.matmul %69, %70, %cst_24 {dimension_numbers = #tpu.dot_dimension_numbers<[1], [1], [0], [0], [0, 0, 1, 0], [], []>} : vector<16x8xbf16>, vector<10x8xbf16>, vector<16x10xf32> -> vector<16x10xf32>
    %72 = arith.addf %68, %71 : vector<16x10xf32>
    %cst_25 = arith.constant dense<0xFF800000> : vector<16xf32>
    %73 = vector.multi_reduction <maximumf>, %72, %cst_25 [1] : vector<16x10xf32> to vector<16xf32>
    %74 = vector.shape_cast %73 : vector<16xf32> to vector<16x1xf32>
    %75 = vector.broadcast %74 : vector<16x1xf32> to vector<16x10xf32>
    %76 = arith.subf %72, %75 : vector<16x10xf32>
    %77 = math.exp %76 : vector<16x10xf32>
    %cst_26 = arith.constant dense<0.000000e+00> : vector<16xf32>
    %78 = vector.multi_reduction <add>, %77, %cst_26 [1] : vector<16x10xf32> to vector<16xf32>
    %79 = vector.shape_cast %78 : vector<16xf32> to vector<16x1xf32>
    %80 = tpu.reciprocal %79 {approx = true} : vector<16x1xf32> -> vector<16x1xf32>
    %81 = vector.broadcast %80 : vector<16x1xf32> to vector<16x10xf32>
    %82 = arith.mulf %77, %81 : vector<16x10xf32>
    %83 = arith.truncf %82 : vector<16x10xf32> to vector<16x10xbf16>
    %84 = vector.extract_strided_slice %44 {offsets = [0, 0], sizes = [10, 16], strides = [1, 1]} : vector<10x64xbf16> to vector<10x16xbf16>
    %cst_27 = arith.constant dense<0.000000e+00> : vector<16x16xf32>
    %85 = tpu.matmul %83, %84, %cst_27 {dimension_numbers = #tpu.dot_dimension_numbers<[1], [0], [0], [1], [0, 0, 1, 1], [], []>} : vector<16x10xbf16>, vector<10x16xbf16>, vector<16x16xf32> -> vector<16x16xf32>
    %86 = vector.broadcast %42 : f32 to vector<16x16xf32>
    %87 = arith.mulf %86, %85 : vector<16x16xf32>
    %88 = arith.addf %65, %87 : vector<16x16xf32>
    %89 = vector.extract_strided_slice %27 {offsets = [0, 8], sizes = [16, 8], strides = [1, 1]} : vector<16x32xbf16> to vector<16x8xbf16>
    %90 = vector.extract_strided_slice %35 {offsets = [0, 8], sizes = [16, 8], strides = [1, 1]} : vector<16x32xbf16> to vector<16x8xbf16>
    %cst_28 = arith.constant dense<0.000000e+00> : vector<16x16xf32>
    %91 = tpu.matmul %89, %90, %cst_28 {dimension_numbers = #tpu.dot_dimension_numbers<[1], [1], [0], [0], [0, 0, 1, 0], [], []>} : vector<16x8xbf16>, vector<16x8xbf16>, vector<16x16xf32> -> vector<16x16xf32>
    %92 = vector.extract_strided_slice %31 {offsets = [0, 8], sizes = [16, 8], strides = [1, 1]} : vector<16x32xbf16> to vector<16x8xbf16>
    %93 = vector.extract_strided_slice %39 {offsets = [0, 8], sizes = [16, 8], strides = [1, 1]} : vector<16x32xbf16> to vector<16x8xbf16>
    %cst_29 = arith.constant dense<0.000000e+00> : vector<16x16xf32>
    %94 = tpu.matmul %92, %93, %cst_29 {dimension_numbers = #tpu.dot_dimension_numbers<[1], [1], [0], [0], [0, 0, 1, 0], [], []>} : vector<16x8xbf16>, vector<16x8xbf16>, vector<16x16xf32> -> vector<16x16xf32>
    %95 = arith.addf %91, %94 : vector<16x16xf32>
    %96 = arith.addf %95, %41 : vector<16x16xf32>
    %cst_30 = arith.constant dense<0xFF800000> : vector<16xf32>
    %97 = vector.multi_reduction <maximumf>, %96, %cst_30 [1] : vector<16x16xf32> to vector<16xf32>
    %98 = vector.shape_cast %97 : vector<16xf32> to vector<16x1xf32>
    %99 = vector.broadcast %98 : vector<16x1xf32> to vector<16x16xf32>
    %100 = arith.subf %96, %99 : vector<16x16xf32>
    %101 = math.exp %100 : vector<16x16xf32>
    %cst_31 = arith.constant dense<0.000000e+00> : vector<16xf32>
    %102 = vector.multi_reduction <add>, %101, %cst_31 [1] : vector<16x16xf32> to vector<16xf32>
    %103 = vector.shape_cast %102 : vector<16xf32> to vector<16x1xf32>
    %104 = tpu.reciprocal %103 {approx = true} : vector<16x1xf32> -> vector<16x1xf32>
    %105 = vector.broadcast %104 : vector<16x1xf32> to vector<16x16xf32>
    %106 = arith.mulf %101, %105 : vector<16x16xf32>
    %107 = arith.truncf %106 : vector<16x16xf32> to vector<16x16xbf16>
    %108 = vector.extract_strided_slice %40 {offsets = [0, 16], sizes = [16, 16], strides = [1, 1]} : vector<16x64xbf16> to vector<16x16xbf16>
    %cst_32 = arith.constant dense<0.000000e+00> : vector<16x16xf32>
    %109 = tpu.matmul %107, %108, %cst_32 {dimension_numbers = #tpu.dot_dimension_numbers<[1], [0], [0], [1], [0, 0, 1, 1], [], []>} : vector<16x16xbf16>, vector<16x16xbf16>, vector<16x16xf32> -> vector<16x16xf32>
    %110 = vector.extract_strided_slice %27 {offsets = [0, 8], sizes = [16, 8], strides = [1, 1]} : vector<16x32xbf16> to vector<16x8xbf16>
    %111 = vector.extract_strided_slice %43 {offsets = [0, 8], sizes = [10, 8], strides = [1, 1]} : vector<10x64xbf16> to vector<10x8xbf16>
    %cst_33 = arith.constant dense<0.000000e+00> : vector<16x10xf32>
    %112 = tpu.matmul %110, %111, %cst_33 {dimension_numbers = #tpu.dot_dimension_numbers<[1], [1], [0], [0], [0, 0, 1, 0], [], []>} : vector<16x8xbf16>, vector<10x8xbf16>, vector<16x10xf32> -> vector<16x10xf32>
    %113 = vector.extract_strided_slice %31 {offsets = [0, 8], sizes = [16, 8], strides = [1, 1]} : vector<16x32xbf16> to vector<16x8xbf16>
    %114 = vector.extract_strided_slice %43 {offsets = [0, 40], sizes = [10, 8], strides = [1, 1]} : vector<10x64xbf16> to vector<10x8xbf16>
    %cst_34 = arith.constant dense<0.000000e+00> : vector<16x10xf32>
    %115 = tpu.matmul %113, %114, %cst_34 {dimension_numbers = #tpu.dot_dimension_numbers<[1], [1], [0], [0], [0, 0, 1, 0], [], []>} : vector<16x8xbf16>, vector<10x8xbf16>, vector<16x10xf32> -> vector<16x10xf32>
    %116 = arith.addf %112, %115 : vector<16x10xf32>
    %cst_35 = arith.constant dense<0xFF800000> : vector<16xf32>
    %117 = vector.multi_reduction <maximumf>, %116, %cst_35 [1] : vector<16x10xf32> to vector<16xf32>
    %118 = vector.shape_cast %117 : vector<16xf32> to vector<16x1xf32>
    %119 = vector.broadcast %118 : vector<16x1xf32> to vector<16x10xf32>
    %120 = arith.subf %116, %119 : vector<16x10xf32>
    %121 = math.exp %120 : vector<16x10xf32>
    %cst_36 = arith.constant dense<0.000000e+00> : vector<16xf32>
    %122 = vector.multi_reduction <add>, %121, %cst_36 [1] : vector<16x10xf32> to vector<16xf32>
    %123 = vector.shape_cast %122 : vector<16xf32> to vector<16x1xf32>
    %124 = tpu.reciprocal %123 {approx = true} : vector<16x1xf32> -> vector<16x1xf32>
    %125 = vector.broadcast %124 : vector<16x1xf32> to vector<16x10xf32>
    %126 = arith.mulf %121, %125 : vector<16x10xf32>
    %127 = arith.truncf %126 : vector<16x10xf32> to vector<16x10xbf16>
    %128 = vector.extract_strided_slice %44 {offsets = [0, 16], sizes = [10, 16], strides = [1, 1]} : vector<10x64xbf16> to vector<10x16xbf16>
    %cst_37 = arith.constant dense<0.000000e+00> : vector<16x16xf32>
    %129 = tpu.matmul %127, %128, %cst_37 {dimension_numbers = #tpu.dot_dimension_numbers<[1], [0], [0], [1], [0, 0, 1, 1], [], []>} : vector<16x10xbf16>, vector<10x16xbf16>, vector<16x16xf32> -> vector<16x16xf32>
    %130 = vector.broadcast %42 : f32 to vector<16x16xf32>
    %131 = arith.mulf %130, %129 : vector<16x16xf32>
    %132 = arith.addf %109, %131 : vector<16x16xf32>
    %133 = vector.extract_strided_slice %27 {offsets = [0, 16], sizes = [16, 8], strides = [1, 1]} : vector<16x32xbf16> to vector<16x8xbf16>
    %134 = vector.extract_strided_slice %35 {offsets = [0, 16], sizes = [16, 8], strides = [1, 1]} : vector<16x32xbf16> to vector<16x8xbf16>
    %cst_38 = arith.constant dense<0.000000e+00> : vector<16x16xf32>
    %135 = tpu.matmul %133, %134, %cst_38 {dimension_numbers = #tpu.dot_dimension_numbers<[1], [1], [0], [0], [0, 0, 1, 0], [], []>} : vector<16x8xbf16>, vector<16x8xbf16>, vector<16x16xf32> -> vector<16x16xf32>
    %136 = vector.extract_strided_slice %31 {offsets = [0, 16], sizes = [16, 8], strides = [1, 1]} : vector<16x32xbf16> to vector<16x8xbf16>
    %137 = vector.extract_strided_slice %39 {offsets = [0, 16], sizes = [16, 8], strides = [1, 1]} : vector<16x32xbf16> to vector<16x8xbf16>
    %cst_39 = arith.constant dense<0.000000e+00> : vector<16x16xf32>
    %138 = tpu.matmul %136, %137, %cst_39 {dimension_numbers = #tpu.dot_dimension_numbers<[1], [1], [0], [0], [0, 0, 1, 0], [], []>} : vector<16x8xbf16>, vector<16x8xbf16>, vector<16x16xf32> -> vector<16x16xf32>
    %139 = arith.addf %135, %138 : vector<16x16xf32>
    %140 = arith.addf %139, %41 : vector<16x16xf32>
    %cst_40 = arith.constant dense<0xFF800000> : vector<16xf32>
    %141 = vector.multi_reduction <maximumf>, %140, %cst_40 [1] : vector<16x16xf32> to vector<16xf32>
    %142 = vector.shape_cast %141 : vector<16xf32> to vector<16x1xf32>
    %143 = vector.broadcast %142 : vector<16x1xf32> to vector<16x16xf32>
    %144 = arith.subf %140, %143 : vector<16x16xf32>
    %145 = math.exp %144 : vector<16x16xf32>
    %cst_41 = arith.constant dense<0.000000e+00> : vector<16xf32>
    %146 = vector.multi_reduction <add>, %145, %cst_41 [1] : vector<16x16xf32> to vector<16xf32>
    %147 = vector.shape_cast %146 : vector<16xf32> to vector<16x1xf32>
    %148 = tpu.reciprocal %147 {approx = true} : vector<16x1xf32> -> vector<16x1xf32>
    %149 = vector.broadcast %148 : vector<16x1xf32> to vector<16x16xf32>
    %150 = arith.mulf %145, %149 : vector<16x16xf32>
    %151 = arith.truncf %150 : vector<16x16xf32> to vector<16x16xbf16>
    %152 = vector.extract_strided_slice %40 {offsets = [0, 32], sizes = [16, 16], strides = [1, 1]} : vector<16x64xbf16> to vector<16x16xbf16>
    %cst_42 = arith.constant dense<0.000000e+00> : vector<16x16xf32>
    %153 = tpu.matmul %151, %152, %cst_42 {dimension_numbers = #tpu.dot_dimension_numbers<[1], [0], [0], [1], [0, 0, 1, 1], [], []>} : vector<16x16xbf16>, vector<16x16xbf16>, vector<16x16xf32> -> vector<16x16xf32>
    %154 = vector.extract_strided_slice %27 {offsets = [0, 16], sizes = [16, 8], strides = [1, 1]} : vector<16x32xbf16> to vector<16x8xbf16>
    %155 = vector.extract_strided_slice %43 {offsets = [0, 16], sizes = [10, 8], strides = [1, 1]} : vector<10x64xbf16> to vector<10x8xbf16>
    %cst_43 = arith.constant dense<0.000000e+00> : vector<16x10xf32>
    %156 = tpu.matmul %154, %155, %cst_43 {dimension_numbers = #tpu.dot_dimension_numbers<[1], [1], [0], [0], [0, 0, 1, 0], [], []>} : vector<16x8xbf16>, vector<10x8xbf16>, vector<16x10xf32> -> vector<16x10xf32>
    %157 = vector.extract_strided_slice %31 {offsets = [0, 16], sizes = [16, 8], strides = [1, 1]} : vector<16x32xbf16> to vector<16x8xbf16>
    %158 = vector.extract_strided_slice %43 {offsets = [0, 48], sizes = [10, 8], strides = [1, 1]} : vector<10x64xbf16> to vector<10x8xbf16>
    %cst_44 = arith.constant dense<0.000000e+00> : vector<16x10xf32>
    %159 = tpu.matmul %157, %158, %cst_44 {dimension_numbers = #tpu.dot_dimension_numbers<[1], [1], [0], [0], [0, 0, 1, 0], [], []>} : vector<16x8xbf16>, vector<10x8xbf16>, vector<16x10xf32> -> vector<16x10xf32>
    %160 = arith.addf %156, %159 : vector<16x10xf32>
    %cst_45 = arith.constant dense<0xFF800000> : vector<16xf32>
    %161 = vector.multi_reduction <maximumf>, %160, %cst_45 [1] : vector<16x10xf32> to vector<16xf32>
    %162 = vector.shape_cast %161 : vector<16xf32> to vector<16x1xf32>
    %163 = vector.broadcast %162 : vector<16x1xf32> to vector<16x10xf32>
    %164 = arith.subf %160, %163 : vector<16x10xf32>
    %165 = math.exp %164 : vector<16x10xf32>
    %cst_46 = arith.constant dense<0.000000e+00> : vector<16xf32>
    %166 = vector.multi_reduction <add>, %165, %cst_46 [1] : vector<16x10xf32> to vector<16xf32>
    %167 = vector.shape_cast %166 : vector<16xf32> to vector<16x1xf32>
    %168 = tpu.reciprocal %167 {approx = true} : vector<16x1xf32> -> vector<16x1xf32>
    %169 = vector.broadcast %168 : vector<16x1xf32> to vector<16x10xf32>
    %170 = arith.mulf %165, %169 : vector<16x10xf32>
    %171 = arith.truncf %170 : vector<16x10xf32> to vector<16x10xbf16>
    %172 = vector.extract_strided_slice %44 {offsets = [0, 32], sizes = [10, 16], strides = [1, 1]} : vector<10x64xbf16> to vector<10x16xbf16>
    %cst_47 = arith.constant dense<0.000000e+00> : vector<16x16xf32>
    %173 = tpu.matmul %171, %172, %cst_47 {dimension_numbers = #tpu.dot_dimension_numbers<[1], [0], [0], [1], [0, 0, 1, 1], [], []>} : vector<16x10xbf16>, vector<10x16xbf16>, vector<16x16xf32> -> vector<16x16xf32>
    %174 = vector.broadcast %42 : f32 to vector<16x16xf32>
    %175 = arith.mulf %174, %173 : vector<16x16xf32>
    %176 = arith.addf %153, %175 : vector<16x16xf32>
    %177 = vector.extract_strided_slice %27 {offsets = [0, 24], sizes = [16, 8], strides = [1, 1]} : vector<16x32xbf16> to vector<16x8xbf16>
    %178 = vector.extract_strided_slice %35 {offsets = [0, 24], sizes = [16, 8], strides = [1, 1]} : vector<16x32xbf16> to vector<16x8xbf16>
    %cst_48 = arith.constant dense<0.000000e+00> : vector<16x16xf32>
    %179 = tpu.matmul %177, %178, %cst_48 {dimension_numbers = #tpu.dot_dimension_numbers<[1], [1], [0], [0], [0, 0, 1, 0], [], []>} : vector<16x8xbf16>, vector<16x8xbf16>, vector<16x16xf32> -> vector<16x16xf32>
    %180 = vector.extract_strided_slice %31 {offsets = [0, 24], sizes = [16, 8], strides = [1, 1]} : vector<16x32xbf16> to vector<16x8xbf16>
    %181 = vector.extract_strided_slice %39 {offsets = [0, 24], sizes = [16, 8], strides = [1, 1]} : vector<16x32xbf16> to vector<16x8xbf16>
    %cst_49 = arith.constant dense<0.000000e+00> : vector<16x16xf32>
    %182 = tpu.matmul %180, %181, %cst_49 {dimension_numbers = #tpu.dot_dimension_numbers<[1], [1], [0], [0], [0, 0, 1, 0], [], []>} : vector<16x8xbf16>, vector<16x8xbf16>, vector<16x16xf32> -> vector<16x16xf32>
    %183 = arith.addf %179, %182 : vector<16x16xf32>
    %184 = arith.addf %183, %41 : vector<16x16xf32>
    %cst_50 = arith.constant dense<0xFF800000> : vector<16xf32>
    %185 = vector.multi_reduction <maximumf>, %184, %cst_50 [1] : vector<16x16xf32> to vector<16xf32>
    %186 = vector.shape_cast %185 : vector<16xf32> to vector<16x1xf32>
    %187 = vector.broadcast %186 : vector<16x1xf32> to vector<16x16xf32>
    %188 = arith.subf %184, %187 : vector<16x16xf32>
    %189 = math.exp %188 : vector<16x16xf32>
    %cst_51 = arith.constant dense<0.000000e+00> : vector<16xf32>
    %190 = vector.multi_reduction <add>, %189, %cst_51 [1] : vector<16x16xf32> to vector<16xf32>
    %191 = vector.shape_cast %190 : vector<16xf32> to vector<16x1xf32>
    %192 = tpu.reciprocal %191 {approx = true} : vector<16x1xf32> -> vector<16x1xf32>
    %193 = vector.broadcast %192 : vector<16x1xf32> to vector<16x16xf32>
    %194 = arith.mulf %189, %193 : vector<16x16xf32>
    %195 = arith.truncf %194 : vector<16x16xf32> to vector<16x16xbf16>
    %196 = vector.extract_strided_slice %40 {offsets = [0, 48], sizes = [16, 16], strides = [1, 1]} : vector<16x64xbf16> to vector<16x16xbf16>
    %cst_52 = arith.constant dense<0.000000e+00> : vector<16x16xf32>
    %197 = tpu.matmul %195, %196, %cst_52 {dimension_numbers = #tpu.dot_dimension_numbers<[1], [0], [0], [1], [0, 0, 1, 1], [], []>} : vector<16x16xbf16>, vector<16x16xbf16>, vector<16x16xf32> -> vector<16x16xf32>
    %198 = vector.extract_strided_slice %27 {offsets = [0, 24], sizes = [16, 8], strides = [1, 1]} : vector<16x32xbf16> to vector<16x8xbf16>
    %199 = vector.extract_strided_slice %43 {offsets = [0, 24], sizes = [10, 8], strides = [1, 1]} : vector<10x64xbf16> to vector<10x8xbf16>
    %cst_53 = arith.constant dense<0.000000e+00> : vector<16x10xf32>
    %200 = tpu.matmul %198, %199, %cst_53 {dimension_numbers = #tpu.dot_dimension_numbers<[1], [1], [0], [0], [0, 0, 1, 0], [], []>} : vector<16x8xbf16>, vector<10x8xbf16>, vector<16x10xf32> -> vector<16x10xf32>
    %201 = vector.extract_strided_slice %31 {offsets = [0, 24], sizes = [16, 8], strides = [1, 1]} : vector<16x32xbf16> to vector<16x8xbf16>
    %202 = vector.extract_strided_slice %43 {offsets = [0, 56], sizes = [10, 8], strides = [1, 1]} : vector<10x64xbf16> to vector<10x8xbf16>
    %cst_54 = arith.constant dense<0.000000e+00> : vector<16x10xf32>
    %203 = tpu.matmul %201, %202, %cst_54 {dimension_numbers = #tpu.dot_dimension_numbers<[1], [1], [0], [0], [0, 0, 1, 0], [], []>} : vector<16x8xbf16>, vector<10x8xbf16>, vector<16x10xf32> -> vector<16x10xf32>
    %204 = arith.addf %200, %203 : vector<16x10xf32>
    %cst_55 = arith.constant dense<0xFF800000> : vector<16xf32>
    %205 = vector.multi_reduction <maximumf>, %204, %cst_55 [1] : vector<16x10xf32> to vector<16xf32>
    %206 = vector.shape_cast %205 : vector<16xf32> to vector<16x1xf32>
    %207 = vector.broadcast %206 : vector<16x1xf32> to vector<16x10xf32>
    %208 = arith.subf %204, %207 : vector<16x10xf32>
    %209 = math.exp %208 : vector<16x10xf32>
    %cst_56 = arith.constant dense<0.000000e+00> : vector<16xf32>
    %210 = vector.multi_reduction <add>, %209, %cst_56 [1] : vector<16x10xf32> to vector<16xf32>
    %211 = vector.shape_cast %210 : vector<16xf32> to vector<16x1xf32>
    %212 = tpu.reciprocal %211 {approx = true} : vector<16x1xf32> -> vector<16x1xf32>
    %213 = vector.broadcast %212 : vector<16x1xf32> to vector<16x10xf32>
    %214 = arith.mulf %209, %213 : vector<16x10xf32>
    %215 = arith.truncf %214 : vector<16x10xf32> to vector<16x10xbf16>
    %216 = vector.extract_strided_slice %44 {offsets = [0, 48], sizes = [10, 16], strides = [1, 1]} : vector<10x64xbf16> to vector<10x16xbf16>
    %cst_57 = arith.constant dense<0.000000e+00> : vector<16x16xf32>
    %217 = tpu.matmul %215, %216, %cst_57 {dimension_numbers = #tpu.dot_dimension_numbers<[1], [0], [0], [1], [0, 0, 1, 1], [], []>} : vector<16x10xbf16>, vector<10x16xbf16>, vector<16x16xf32> -> vector<16x16xf32>
    %218 = vector.broadcast %42 : f32 to vector<16x16xf32>
    %219 = arith.mulf %218, %217 : vector<16x16xf32>
    %220 = arith.addf %197, %219 : vector<16x16xf32>
    %221 = tpu.concatenate %88, %132, %176, %220 in 1 : vector<16x16xf32>, vector<16x16xf32>, vector<16x16xf32>, vector<16x16xf32> -> vector<16x64xf32>
    %222 = arith.truncf %221 : vector<16x64xf32> to vector<16x64xbf16>
    %c0_58 = arith.constant 0 : index
    %c0_59 = arith.constant 0 : index
    %223 = vector.load %arg5[%c0_58, %c0_59] : memref<64x64xbf16, #tpu.memory_space<vmem>>, vector<64x64xbf16>
    %cst_60 = arith.constant dense<0.000000e+00> : vector<16x64xf32>
    %224 = tpu.matmul %222, %223, %cst_60 {dimension_numbers = #tpu.dot_dimension_numbers<[1], [0], [0], [1], [0, 0, 1, 1], [], []>} : vector<16x64xbf16>, vector<64x64xbf16>, vector<16x64xf32> -> vector<16x64xf32>
    %225 = arith.addf %0, %224 : vector<16x64xf32>
    %226 = arith.mulf %225, %225 : vector<16x64xf32>
    %cst_61 = arith.constant dense<0.000000e+00> : vector<16xf32>
    %227 = vector.multi_reduction <add>, %226, %cst_61 [1] : vector<16x64xf32> to vector<16xf32>
    %228 = vector.shape_cast %227 : vector<16xf32> to vector<16x1xf32>
    %cst_62 = arith.constant 6.400000e+01 : f32
    %229 = vector.broadcast %cst_62 : f32 to vector<16x1xf32>
    %230 = arith.divf %228, %229 : vector<16x1xf32>
    %cst_63 = arith.constant 9.99999974E-6 : f32
    %231 = vector.broadcast %cst_63 : f32 to vector<16x1xf32>
    %232 = arith.addf %230, %231 : vector<16x1xf32>
    %233 = math.rsqrt %232 : vector<16x1xf32>
    %234 = vector.broadcast %233 : vector<16x1xf32> to vector<16x64xf32>
    %235 = arith.mulf %225, %234 : vector<16x64xf32>
    %c0_64 = arith.constant 0 : index
    %c0_65 = arith.constant 0 : index
    %236 = vector.load %arg3[%c0_64, %c0_65] : memref<1x64xf32, #tpu.memory_space<vmem>>, vector<1x64xf32>
    %237 = vector.broadcast %236 : vector<1x64xf32> to vector<16x64xf32>
    %238 = arith.mulf %235, %237 : vector<16x64xf32>
    %239 = arith.truncf %238 : vector<16x64xf32> to vector<16x64xbf16>
    %c0_66 = arith.constant 0 : index
    %c0_67 = arith.constant 0 : index
    %240 = vector.load %arg10[%c0_66, %c0_67] : memref<64x256xbf16, #tpu.memory_space<vmem>>, vector<64x256xbf16>
    %cst_68 = arith.constant dense<0.000000e+00> : vector<16x256xf32>
    %241 = tpu.matmul %239, %240, %cst_68 {dimension_numbers = #tpu.dot_dimension_numbers<[1], [0], [0], [1], [0, 0, 1, 1], [], []>} : vector<16x64xbf16>, vector<64x256xbf16>, vector<16x256xf32> -> vector<16x256xf32>
    %c0_69 = arith.constant 0 : index
    %c0_70 = arith.constant 0 : index
    %242 = vector.load %arg11[%c0_69, %c0_70] : memref<64x256xbf16, #tpu.memory_space<vmem>>, vector<64x256xbf16>
    %cst_71 = arith.constant dense<0.000000e+00> : vector<16x256xf32>
    %243 = tpu.matmul %239, %242, %cst_71 {dimension_numbers = #tpu.dot_dimension_numbers<[1], [0], [0], [1], [0, 0, 1, 1], [], []>} : vector<16x64xbf16>, vector<64x256xbf16>, vector<16x256xf32> -> vector<16x256xf32>
    %244 = arith.negf %241 : vector<16x256xf32>
    %245 = math.exp %244 : vector<16x256xf32>
    %cst_72 = arith.constant 1.000000e+00 : f32
    %246 = vector.broadcast %cst_72 : f32 to vector<16x256xf32>
    %247 = arith.addf %246, %245 : vector<16x256xf32>
    %248 = arith.divf %246, %247 : vector<16x256xf32>
    %249 = arith.mulf %241, %248 : vector<16x256xf32>
    %250 = arith.mulf %249, %243 : vector<16x256xf32>
    %251 = arith.truncf %250 : vector<16x256xf32> to vector<16x256xbf16>
    %c0_73 = arith.constant 0 : index
    %c0_74 = arith.constant 0 : index
    %252 = vector.load %arg12[%c0_73, %c0_74] : memref<256x64xbf16, #tpu.memory_space<vmem>>, vector<256x64xbf16>
    %cst_75 = arith.constant dense<0.000000e+00> : vector<16x64xf32>
    %253 = tpu.matmul %251, %252, %cst_75 {dimension_numbers = #tpu.dot_dimension_numbers<[1], [0], [0], [1], [0, 0, 1, 1], [], []>} : vector<16x256xbf16>, vector<256x64xbf16>, vector<16x64xf32> -> vector<16x64xf32>
    %254 = arith.addf %225, %253 : vector<16x64xf32>
    %c0_76 = arith.constant 0 : index
    %c0_77 = arith.constant 0 : index
    %255 = vector.load %arg13[%c0_76, %c0_77] : memref<16x64xf32, #tpu.memory_space<vmem>>, vector<16x64xf32>
    tpu.vector_store %arg13[%c0_76, %c0_77], %254 {strides = array<i32>} : memref<16x64xf32, #tpu.memory_space<vmem>>, vector<16x64xf32>,
    return
  }
}

</mosaic_0001>

<llo_original>
// kernel: tpu_custom_call.1
$region0: #{tpu_custom_call.1}
  #allocation0 [shape = 'u32[]', space=smem, size = 0x4, offset = 0x4, fixed_abs, tag = 'smem constant byte address 0x4 - core index']
  #allocation1 [shape = 'u32[144,128]{1,0:T(1,128)}', space=vmem, size = 0x12000, scoped, tag = 'internal scratch']
  #allocation2 [shape = 'f32[1]{0:T(128)S(6)}', space=smem, size = 0x200, scoped, tag = 'scoped memory for tpu_custom_call.1']
  %s0 = inlined_call_operand.<no memory space> [shape: f32[1], index: 0, kind: input, shape index: {}]
  %s1 = inlined_call_operand.hbm [shape: f32[16,64], index: 1, kind: input, shape index: {}]
  %s2 = inlined_call_operand.vmem [shape: f32[1,64], index: 2, kind: input, shape index: {}]
  %s3 = inlined_call_operand.vmem [shape: f32[1,64], index: 3, kind: input, shape index: {}]
  %s4 = inlined_call_operand.vmem [shape: bf16[64,192], index: 4, kind: input, shape index: {}]
  %s5 = inlined_call_operand.hbm [shape: bf16[64,64], index: 5, kind: input, shape index: {}]
  %s6 = inlined_call_operand.vmem [shape: bf16[10,128], index: 6, kind: input, shape index: {}]
  %s7 = inlined_call_operand.hbm [shape: f32[16,32], index: 7, kind: input, shape index: {}]
  %s8 = inlined_call_operand.hbm [shape: f32[16,32], index: 8, kind: input, shape index: {}]
  %s9 = inlined_call_operand.hbm [shape: f32[16,16], index: 9, kind: input, shape index: {}]
  %s10 = inlined_call_operand.vmem [shape: bf16[64,256], index: 10, kind: input, shape index: {}]
  %s11 = inlined_call_operand.vmem [shape: bf16[64,256], index: 11, kind: input, shape index: {}]
  %s12 = inlined_call_operand.vmem [shape: bf16[256,64], index: 12, kind: input, shape index: {}]
  %s13 = inlined_call_operand.hbm [shape: f32[16,64], index: 13, kind: output, shape index: {}]
  %s14 = sld [smem:[#allocation0]]
  $region82: #{tpu_custom_call.1} parent=0
    _
  %s16 = ssub.s32 1, %s14
  %s17 = scalar_select 0, %s16, %s14
  %18 = sst [smem:[#allocation2]] %s0
  $region1: #{tpu_custom_call.1} parent=0
    #allocation3 [shape = 'u8[8192]{0}', space=vmem, size = 0x2000, scoped, tag = 'input window, operand 1, single buffered']
    #allocation4 [shape = 's32[1]{0}', space=sflag, size = 0x4, scoped, tag = 'scoped memory for tpu_custom_call.1']
    #allocation5 [shape = 's32[1]{0}', space=sflag, size = 0x4, scoped, tag = 'scoped memory for tpu_custom_call.1']
    #allocation6 [shape = 'u8[16384]{0}', space=vmem, size = 0x4000, scoped, tag = 'input window, operand 5, single buffered']
    #allocation7 [shape = 's32[1]{0}', space=sflag, size = 0x4, scoped, tag = 'scoped memory for tpu_custom_call.1']
    #allocation8 [shape = 'u8[8192]{0}', space=vmem, size = 0x2000, scoped, tag = 'input window, operand 7, single buffered']
    #allocation9 [shape = 'u8[8192]{0}', space=vmem, size = 0x2000, scoped, tag = 'input window, operand 8, single buffered']
    #allocation10 [shape = 's32[1]{0}', space=sflag, size = 0x4, scoped, tag = 'scoped memory for tpu_custom_call.1']
    #allocation11 [shape = 'u8[8192]{0}', space=vmem, size = 0x2000, scoped, tag = 'input window, operand 9, single buffered']
    #allocation12 [shape = 'u8[8192]{0}', space=vmem, size = 0x2000, scoped, tag = 'output window, operand 0, single buffered']
    %19 = vsyncpa [#allocation4], 0
    %20 = vsyncpa [#allocation7], 0
    %21 = vsyncpa [#allocation10], 0
    %22 = vsyncpa [#allocation5], 0
    // Predicated region
    $region2: #{tpu_custom_call.1} parent=1 // pred_check
      _
    $region3: #{tpu_custom_call.1} parent=1 // pred_check_branch
      %24 = sbr.rel (0) target = $region5
    $region4: #{tpu_custom_call.1} parent=1 // pred_region
      _
    $region5: #{tpu_custom_call.1} parent=1 // pred_fallthru
      _
    // Predicated region
    $region6: #{tpu_custom_call.1} parent=1 // pred_check
      _
    $region7: #{tpu_custom_call.1} parent=1 // pred_check_branch
      %26 = sbr.rel (0) target = $region9
    $region8: #{tpu_custom_call.1} parent=1 // pred_region
      %s28 = ssub.s32 256, 256
      %29 = vsyncadd [#allocation4], %s28
      %s30 = sshll.u32 [#allocation3], 4
      %s31 = int_to_ptr.vmem [resolvable:$true] %s30
      %36 = dma.hbm_to_vmem [thread:$0]  %s1, 256, %s31, [#allocation4], 128, 128, 8
    $region9: #{tpu_custom_call.1} parent=1 // pred_fallthru
      _
    // Predicated region
    $region10: #{tpu_custom_call.1} parent=1 // pred_check
      _
    $region11: #{tpu_custom_call.1} parent=1 // pred_check_branch
      %38 = sbr.rel (0) target = $region13
    $region12: #{tpu_custom_call.1} parent=1 // pred_region
      _
    $region13: #{tpu_custom_call.1} parent=1 // pred_fallthru
      _
    // Predicated region
    $region14: #{tpu_custom_call.1} parent=1 // pred_check
      _
    $region15: #{tpu_custom_call.1} parent=1 // pred_check_branch
      %40 = sbr.rel (0) target = $region17
    $region16: #{tpu_custom_call.1} parent=1 // pred_region
      _
    $region17: #{tpu_custom_call.1} parent=1 // pred_fallthru
      _
    // Predicated region
    $region18: #{tpu_custom_call.1} parent=1 // pred_check
      _
    $region19: #{tpu_custom_call.1} parent=1 // pred_check_branch
      %42 = sbr.rel (0) target = $region21
    $region20: #{tpu_custom_call.1} parent=1 // pred_region
      _
    $region21: #{tpu_custom_call.1} parent=1 // pred_fallthru
      _
    // Predicated region
    $region22: #{tpu_custom_call.1} parent=1 // pred_check
      _
    $region23: #{tpu_custom_call.1} parent=1 // pred_check_branch
      %44 = sbr.rel (0) target = $region25
    $region24: #{tpu_custom_call.1} parent=1 // pred_region
      %s46 = ssub.s32 512, 512
      %47 = vsyncadd [#allocation7], %s46
      %s48 = sshll.u32 [#allocation6], 4
      %s49 = int_to_ptr.vmem [resolvable:$true] %s48
      %54 = dma.hbm_to_vmem [thread:$0]  %s5, 512, %s49, [#allocation7], 64, 64, 4
    $region25: #{tpu_custom_call.1} parent=1 // pred_fallthru
      _
    // Predicated region
    $region26: #{tpu_custom_call.1} parent=1 // pred_check
      _
    $region27: #{tpu_custom_call.1} parent=1 // pred_check_branch
      %56 = sbr.rel (0) target = $region29
    $region28: #{tpu_custom_call.1} parent=1 // pred_region
      _
    $region29: #{tpu_custom_call.1} parent=1 // pred_fallthru
      _
    // Predicated region
    $region30: #{tpu_custom_call.1} parent=1 // pred_check
      _
    $region31: #{tpu_custom_call.1} parent=1 // pred_check_branch
      %58 = sbr.rel (0) target = $region33
    $region32: #{tpu_custom_call.1} parent=1 // pred_region
      %s60 = ssub.s32 256, 256
      %61 = vsyncadd [#allocation7], %s60
      %s62 = sshll.u32 [#allocation8], 4
      %s63 = int_to_ptr.vmem [resolvable:$true] %s62
      %68 = dma.hbm_to_vmem [thread:$0]  %s7, 256, %s63, [#allocation7], 128, 128, 8
    $region33: #{tpu_custom_call.1} parent=1 // pred_fallthru
      _
    // Predicated region
    $region34: #{tpu_custom_call.1} parent=1 // pred_check
      _
    $region35: #{tpu_custom_call.1} parent=1 // pred_check_branch
      %70 = sbr.rel (0) target = $region37
    $region36: #{tpu_custom_call.1} parent=1 // pred_region
      %s72 = ssub.s32 256, 256
      %73 = vsyncadd [#allocation10], %s72
      %s74 = sshll.u32 [#allocation9], 4
      %s75 = int_to_ptr.vmem [resolvable:$true] %s74
      %80 = dma.hbm_to_vmem [thread:$0]  %s8, 256, %s75, [#allocation10], 128, 128, 8
    $region37: #{tpu_custom_call.1} parent=1 // pred_fallthru
      _
    // Predicated region
    $region38: #{tpu_custom_call.1} parent=1 // pred_check
      _
    $region39: #{tpu_custom_call.1} parent=1 // pred_check_branch
      %82 = sbr.rel (0) target = $region41
    $region40: #{tpu_custom_call.1} parent=1 // pred_region
      %s84 = ssub.s32 256, 256
      %85 = vsyncadd [#allocation10], %s84
      %s86 = sshll.u32 [#allocation11], 4
      %s87 = int_to_ptr.vmem [resolvable:$true] %s86
      %92 = dma.hbm_to_vmem [thread:$0]  %s9, 256, %s87, [#allocation10], 128, 128, 8
    $region41: #{tpu_custom_call.1} parent=1 // pred_fallthru
      _
    // Predicated region
    $region42: #{tpu_custom_call.1} parent=1 // pred_check
      _
    $region43: #{tpu_custom_call.1} parent=1 // pred_check_branch
      %94 = sbr.rel (0) target = $region45
    $region44: #{tpu_custom_call.1} parent=1 // pred_region
      _
    $region45: #{tpu_custom_call.1} parent=1 // pred_fallthru
      _
    // Predicated region
    $region46: #{tpu_custom_call.1} parent=1 // pred_check
      _
    $region47: #{tpu_custom_call.1} parent=1 // pred_check_branch
      %96 = sbr.rel (0) target = $region49
    $region48: #{tpu_custom_call.1} parent=1 // pred_region
      _
    $region49: #{tpu_custom_call.1} parent=1 // pred_fallthru
      _
    // Predicated region
    $region50: #{tpu_custom_call.1} parent=1 // pred_check
      _
    $region51: #{tpu_custom_call.1} parent=1 // pred_check_branch
      %98 = sbr.rel (0) target = $region53
    $region52: #{tpu_custom_call.1} parent=1 // pred_region
      _
    $region53: #{tpu_custom_call.1} parent=1 // pred_fallthru
      _
    // Predicated region
    $region54: #{tpu_custom_call.1} parent=1 // pred_check
      _
    $region55: #{tpu_custom_call.1} parent=1 // pred_check_branch
      %100 = sbr.rel (0) target = $region57
    $region56: #{tpu_custom_call.1} parent=1 // pred_region
      %101 = dma.done [#allocation4], 256
    $region57: #{tpu_custom_call.1} parent=1 // pred_fallthru
      _
    // Predicated region
    $region58: #{tpu_custom_call.1} parent=1 // pred_check
      _
    $region59: #{tpu_custom_call.1} parent=1 // pred_check_branch
      %103 = sbr.rel (0) target = $region61
    $region60: #{tpu_custom_call.1} parent=1 // pred_region
      %104 = dma.done [#allocation7], 512
    $region61: #{tpu_custom_call.1} parent=1 // pred_fallthru
      _
    // Predicated region
    $region62: #{tpu_custom_call.1} parent=1 // pred_check
      _
    $region63: #{tpu_custom_call.1} parent=1 // pred_check_branch
      %106 = sbr.rel (0) target = $region65
    $region64: #{tpu_custom_call.1} parent=1 // pred_region
      %107 = dma.done [#allocation7], 256
    $region65: #{tpu_custom_call.1} parent=1 // pred_fallthru
      _
    // Predicated region
    $region66: #{tpu_custom_call.1} parent=1 // pred_check
      _
    $region67: #{tpu_custom_call.1} parent=1 // pred_check_branch
      %109 = sbr.rel (0) target = $region69
    $region68: #{tpu_custom_call.1} parent=1 // pred_region
      %110 = dma.done [#allocation10], 256
    $region69: #{tpu_custom_call.1} parent=1 // pred_fallthru
      _
    // Predicated region
    $region70: #{tpu_custom_call.1} parent=1 // pred_check
      _
    $region71: #{tpu_custom_call.1} parent=1 // pred_check_branch
      %112 = sbr.rel (0) target = $region73
    $region72: #{tpu_custom_call.1} parent=1 // pred_region
      %113 = dma.done [#allocation10], 256
    $region73: #{tpu_custom_call.1} parent=1 // pred_fallthru
      _
    %v115 = vld [vmem:[#allocation3] sm:$0xff]
    %v116 = vld [vmem:[#allocation3 + $0x8] sm:$0xff]
    %v117 = vmul.f32 %v115, %v115
    %v118 = vmul.f32 %v116, %v116
    %vm119 = vcmask 523264
    %v120 = vsel %vm119, %v117, 0.0
    %121 = vadd.xlane.f32.xlu0 %v120
    %v122 = vpop.xlane.xlu0 %121
    %v123 = vsel %vm119, %v118, 0.0
    %124 = vadd.xlane.f32.xlu0 %v123
    %v125 = vpop.xlane.xlu0 %124
    %v126 = vrcp.pop 64.0
    %v127 = vmul.f32 %v122, %v126
    %v128 = vmul.f32 %v125, %v126
    %v129 = vadd.f32 %v127, 1e-05
    %v130 = vadd.f32 %v128, 1e-05
    %v131 = vrsqrt.pop %v129
    %v132 = vrsqrt.pop %v130
    %v133 = vmul.f32 %v115, %v131
    %v134 = vmul.f32 %v116, %v132
    %v135 = vld [vmem:[%s2] sm:$0x1]
    %v137 = vlaneseq
    %v138 = vshrl.u32 %v137, 7
    %v139 = vsub.s32 0, %v138
    %v140 = vrot.slane %v135, %v139
    %v142 = vmul.f32 %v133, %v140
    %v143 = vmul.f32 %v134, %v140
    %v144 = vpack.c.bf16 %v143, %v142
    %v145 = vld [vmem:[%s4] sm:$0xff]
    %v146 = vld [vmem:[%s4 + $0x8] sm:$0xff]
    %v147 = vld [vmem:[%s4 + $0x10] sm:$0xff]
    %v148 = vld [vmem:[%s4 + $0x18] sm:$0xff]
    %v149 = vld [vmem:[%s4 + $0x20] sm:$0xff]
    %v150 = vld [vmem:[%s4 + $0x28] sm:$0xff]
    %v151 = vld [vmem:[%s4 + $0x30] sm:$0xff]
    %v152 = vld [vmem:[%s4 + $0x38] sm:$0xff]
    %v161 = vunpack.c.l.b16 %v145
    %v162 = vunpack.c.h.b16 %v145
    %v163 = vunpack.c.l.b16 %v146
    %v164 = vunpack.c.h.b16 %v146
    %v165 = vunpack.c.l.b16 %v147
    %v166 = vunpack.c.h.b16 %v147
    %v167 = vunpack.c.l.b16 %v148
    %v168 = vunpack.c.h.b16 %v148
    %v169 = vunpack.c.l.b16 %v149
    %v170 = vunpack.c.h.b16 %v149
    %v171 = vunpack.c.l.b16 %v150
    %v172 = vunpack.c.h.b16 %v150
    %v173 = vunpack.c.l.b16 %v151
    %v174 = vunpack.c.h.b16 %v151
    %v175 = vunpack.c.l.b16 %v152
    %v176 = vunpack.c.h.b16 %v152
    %v177 = vpack.c.b16 %v163, %v161
    %v178 = vpack.c.b16 %v164, %v162
    %v179 = vpack.c.b16 %v167, %v165
    %v180 = vpack.c.b16 %v168, %v166
    %v181 = vpack.c.b16 %v171, %v169
    %v182 = vpack.c.b16 %v172, %v170
    %v183 = vpack.c.b16 %v175, %v173
    %v184 = vpack.c.b16 %v176, %v174
    %v194 = vsel %vm119, %v144, 0
    %196 = vmatprep.subr.bf16.mxu0 0
    %197 = vmatpush1.bf16.msra.mxu0 0
    %198 = vmatprep.subr.bf16.mxu0 0
    %199 = vmatpush1.bf16.msra.mxu0 0
    %200 = vmatprep.subr.bf16.mxu0 0
    %201 = vmatpush1.bf16.msra.mxu0 0
    %202 = vmatprep.subr.bf16.mxu0 0
    %203 = vmatpush1.bf16.msra.mxu0 0
    %204 = vmatprep.subr.bf16.mxu0 %v184
    %205 = vmatpush1.bf16.msra.mxu0 %v183
    %206 = vmatprep.subr.bf16.mxu0 %v182
    %207 = vmatpush1.bf16.msra.mxu0 %v181
    %208 = vmatprep.subr.bf16.mxu0 %v180
    %209 = vmatpush1.bf16.msra.mxu0 %v179
    %210 = vmatprep.subr.bf16.mxu0 %v178
    %211 = vmatpush1.bf16.msra.mxu0 %v177
    %212 = vmatprep.subr.bf16.mxu0 0
    %213 = vmatpush2.bf16.msra.mxu0 0
    %214 = vmatprep.subr.bf16.mxu0 0
    %215 = vmatpush2.bf16.msra.mxu0 0
    %216 = vmatprep.subr.bf16.mxu0 0
    %217 = vmatpush2.bf16.msra.mxu0 0
    %218 = vmatprep.subr.bf16.mxu0 0
    %219 = vmatpush2.bf16.msra.mxu0 0
    %220 = vmatprep.subr.bf16.mxu0 0
    %221 = vmatpush2.bf16.msra.mxu0 0
    %222 = vmatprep.subr.bf16.mxu0 0
    %223 = vmatpush2.bf16.msra.mxu0 0
    %224 = vmatprep.subr.bf16.mxu0 0
    %225 = vmatpush2.bf16.msra.mxu0 0
    %226 = vmatprep.subr.bf16.mxu0 0
    %227 = vmatpush2.bf16.msra.mxu0 0
    %228 = vmatprep.mubr.bf16.mxu0 0
    %229 = vmatmul.mubr.bf16.gmra.mxu0 %v194
    %v230 = vpop.f32.mrf.mxu0
    %v231 = vadd.f32 0.0, %v230
    %v232 = vpop.f32.mrf.mxu0
    %v233 = vadd.f32 0.0, %v232
    %v234 = vpop.f32.mrf.mxu0
    %v235 = vadd.f32 0.0, %v234
    %v236 = vpop.f32.mrf.mxu0
    %v237 = vadd.f32 0.0, %v236
    %238 = vdwg.mxu0
    %v239 = vld [vmem:[#allocation8] sm:$0xff]
    %v240 = vld [vmem:[#allocation8 + $0x8] sm:$0xff]
    %v241 = vld [vmem:[#allocation9] sm:$0xff]
    %v242 = vld [vmem:[#allocation9 + $0x8] sm:$0xff]
    %v243 = vmul.f32 %v231, %v239
    %v244 = vmul.f32 %v235, %v240
    %247 = vrot.lane.b32.xlu0 %v241, 32
    %v248 = vpop.permute.xlu0 %247
    %249 = vrot.lane.b32.xlu0 %v242, 32
    %v250 = vpop.permute.xlu0 %249
    %v253 = vmul.f32 %v231, %v248
    %v254 = vmul.f32 %v235, %v250
    %257 = vrot.lane.b32.xlu0 %v253, 96
    %v258 = vpop.permute.xlu0 %257
    %259 = vrot.lane.b32.xlu0 %v254, 96
    %v260 = vpop.permute.xlu0 %259
    %v263 = vsub.f32 %v243, %v258
    %v264 = vsub.f32 %v244, %v260
    %v265 = vpack.c.bf16 %v264, %v263
    %268 = vrot.lane.b32.xlu0 %v239, 32
    %v269 = vpop.permute.xlu0 %268
    %270 = vrot.lane.b32.xlu0 %v240, 32
    %v271 = vpop.permute.xlu0 %270
    %v274 = vmul.f32 %v231, %v269
    %v275 = vmul.f32 %v235, %v271
    %v276 = vmul.f32 %v231, %v241
    %v277 = vmul.f32 %v235, %v242
    %280 = vrot.lane.b32.xlu0 %v276, 32
    %v281 = vpop.permute.xlu0 %280
    %282 = vrot.lane.b32.xlu0 %v277, 32
    %v283 = vpop.permute.xlu0 %282
    %v286 = vadd.f32 %v274, %v281
    %v287 = vadd.f32 %v275, %v283
    %v288 = vpack.c.bf16 %v287, %v286
    %289 = vrot.lane.b32.xlu0 %v239, 64
    %v290 = vpop.permute.xlu0 %289
    %291 = vrot.lane.b32.xlu0 %v240, 64
    %v292 = vpop.permute.xlu0 %291
    %v295 = vmul.f32 %v231, %v290
    %v296 = vmul.f32 %v235, %v292
    %297 = vrot.lane.b32.xlu0 %v241, 96
    %v298 = vpop.permute.xlu0 %297
    %299 = vrot.lane.b32.xlu0 %v242, 96
    %v300 = vpop.permute.xlu0 %299
    %v303 = vmul.f32 %v231, %v298
    %v304 = vmul.f32 %v235, %v300
    %307 = vrot.lane.b32.xlu0 %v303, 96
    %v308 = vpop.permute.xlu0 %307
    %309 = vrot.lane.b32.xlu0 %v304, 96
    %v310 = vpop.permute.xlu0 %309
    %v313 = vsub.f32 %v295, %v308
    %v314 = vsub.f32 %v296, %v310
    %v315 = vpack.c.bf16 %v314, %v313
    %316 = vrot.lane.b32.xlu0 %v239, 96
    %v317 = vpop.permute.xlu0 %316
    %318 = vrot.lane.b32.xlu0 %v240, 96
    %v319 = vpop.permute.xlu0 %318
    %v322 = vmul.f32 %v231, %v317
    %v323 = vmul.f32 %v235, %v319
    %324 = vrot.lane.b32.xlu0 %v241, 64
    %v325 = vpop.permute.xlu0 %324
    %326 = vrot.lane.b32.xlu0 %v242, 64
    %v327 = vpop.permute.xlu0 %326
    %v330 = vmul.f32 %v231, %v325
    %v331 = vmul.f32 %v235, %v327
    %334 = vrot.lane.b32.xlu0 %v330, 32
    %v335 = vpop.permute.xlu0 %334
    %336 = vrot.lane.b32.xlu0 %v331, 32
    %v337 = vpop.permute.xlu0 %336
    %v340 = vadd.f32 %v322, %v335
    %v341 = vadd.f32 %v323, %v337
    %v342 = vpack.c.bf16 %v341, %v340
    %v343 = vpack.c.bf16 %v237, %v233
    %v344 = vld [vmem:[#allocation11] sm:$0xff]
    %v345 = vld [vmem:[#allocation11 + $0x8] sm:$0xff]
    %s346 = sld [smem:[#allocation2]]
    %v347 = vld [vmem:[%s6] sm:$0xf]
    %v348 = vld [vmem:[%s6 + $0x4] sm:$0x1]
    %350 = vrot.lane.b32.xlu0 %v288, 96
    %v351 = vpop.permute.xlu0 %350
    %353 = vrot.lane.b32.xlu0 %v342, 32
    %v354 = vpop.permute.xlu0 %353
    %vm355 = vcmask 64512
    %v357 = vsel %vm355, %v351, 0
    %v360 = vsel %vm355, %v354, 0
    %362 = vmatprep.subr.bf16.mxu0 0
    %363 = vmatpush1.bf16.xpose.msra.mxu0 0
    %364 = vmatprep.subr.bf16.mxu0 0
    %365 = vmatpush1.bf16.xpose.msra.mxu0 0
    %366 = vmatprep.subr.bf16.mxu0 0
    %367 = vmatpush1.bf16.xpose.msra.mxu0 0
    %368 = vmatprep.subr.bf16.mxu0 0
    %369 = vmatpush1.bf16.xpose.msra.mxu0 0
    %370 = vmatprep.subr.bf16.mxu0 0
    %371 = vmatpush1.bf16.xpose.msra.mxu0 0
    %372 = vmatprep.subr.bf16.mxu0 0
    %373 = vmatpush1.bf16.xpose.msra.mxu0 0
    %374 = vmatprep.subr.bf16.mxu0 0
    %375 = vmatpush1.bf16.xpose.msra.mxu0 0
    %376 = vmatprep.subr.bf16.mxu0 0
    %377 = vmatpush1.bf16.xpose.msra.mxu0 %v360
    %378 = vmatprep.subr.bf16.mxu0 0
    %379 = vmatpush2.bf16.xpose.msra.mxu0 0
    %380 = vmatprep.subr.bf16.mxu0 0
    %381 = vmatpush2.bf16.xpose.msra.mxu0 0
    %382 = vmatprep.subr.bf16.mxu0 0
    %383 = vmatpush2.bf16.xpose.msra.mxu0 0
    %384 = vmatprep.subr.bf16.mxu0 0
    %385 = vmatpush2.bf16.xpose.msra.mxu0 0
    %386 = vmatprep.subr.bf16.mxu0 0
    %387 = vmatpush2.bf16.xpose.msra.mxu0 0
    %388 = vmatprep.subr.bf16.mxu0 0
    %389 = vmatpush2.bf16.xpose.msra.mxu0 0
    %390 = vmatprep.subr.bf16.mxu0 0
    %391 = vmatpush2.bf16.xpose.msra.mxu0 0
    %392 = vmatprep.subr.bf16.mxu0 0
    %393 = vmatpush2.bf16.xpose.msra.mxu0 0
    %394 = vmatprep.mubr.bf16.mxu0 0
    %395 = vmatmul.mubr.bf16.gmra.mxu0 %v357
    %v396 = vpop.f32.mrf.mxu0
    %v397 = vadd.f32 0.0, %v396
    %v398 = vpop.f32.mrf.mxu0
    %v399 = vpop.f32.mrf.mxu0
    %v400 = vadd.f32 0.0, %v399
    %v401 = vpop.f32.mrf.mxu0
    %402 = vdwg.mxu0
    %404 = vrot.lane.b32.xlu0 %v315, 64
    %v405 = vpop.permute.xlu0 %404
    %v407 = vsel %vm355, %v265, 0
    %v410 = vsel %vm355, %v405, 0
    %412 = vmatprep.subr.bf16.mxu0 0
    %413 = vmatpush1.bf16.xpose.msra.mxu0 0
    %414 = vmatprep.subr.bf16.mxu0 0
    %415 = vmatpush1.bf16.xpose.msra.mxu0 0
    %416 = vmatprep.subr.bf16.mxu0 0
    %417 = vmatpush1.bf16.xpose.msra.mxu0 0
    %418 = vmatprep.subr.bf16.mxu0 0
    %419 = vmatpush1.bf16.xpose.msra.mxu0 0
    %420 = vmatprep.subr.bf16.mxu0 0
    %421 = vmatpush1.bf16.xpose.msra.mxu0 0
    %422 = vmatprep.subr.bf16.mxu0 0
    %423 = vmatpush1.bf16.xpose.msra.mxu0 0
    %424 = vmatprep.subr.bf16.mxu0 0
    %425 = vmatpush1.bf16.xpose.msra.mxu0 0
    %426 = vmatprep.subr.bf16.mxu0 0
    %427 = vmatpush1.bf16.xpose.msra.mxu0 %v410
    %428 = vmatprep.subr.bf16.mxu0 0
    %429 = vmatpush2.bf16.xpose.msra.mxu0 0
    %430 = vmatprep.subr.bf16.mxu0 0
    %431 = vmatpush2.bf16.xpose.msra.mxu0 0
    %432 = vmatprep.subr.bf16.mxu0 0
    %433 = vmatpush2.bf16.xpose.msra.mxu0 0
    %434 = vmatprep.subr.bf16.mxu0 0
    %435 = vmatpush2.bf16.xpose.msra.mxu0 0
    %436 = vmatprep.subr.bf16.mxu0 0
    %437 = vmatpush2.bf16.xpose.msra.mxu0 0
    %438 = vmatprep.subr.bf16.mxu0 0
    %439 = vmatpush2.bf16.xpose.msra.mxu0 0
    %440 = vmatprep.subr.bf16.mxu0 0
    %441 = vmatpush2.bf16.xpose.msra.mxu0 0
    %442 = vmatprep.subr.bf16.mxu0 0
    %443 = vmatpush2.bf16.xpose.msra.mxu0 0
    %444 = vmatprep.mubr.bf16.mxu0 0
    %445 = vmatmul.mubr.bf16.gmra.mxu0 %v407
    %v446 = vpop.f32.mrf.mxu0
    %v447 = vadd.f32 %v397, %v446
    %v448 = vpop.f32.mrf.mxu0
    %v449 = vpop.f32.mrf.mxu0
    %v450 = vadd.f32 %v400, %v449
    %v451 = vpop.f32.mrf.mxu0
    %452 = vdwg.mxu0
    %v453 = vadd.f32 %v447, %v344
    %v454 = vadd.f32 %v450, %v345
    %vm455 = vcmask 130048
    %v456 = vsel %vm455, %v453, -inf
    %457 = vmax.xlane.f32.xlu0 %v456
    %v458 = vpop.xlane.xlu0 %457
    %v459 = vsel %vm455, %v454, -inf
    %460 = vmax.xlane.f32.xlu0 %v459
    %v461 = vpop.xlane.xlu0 %460
    %v462 = vsub.f32 %v453, %v458
    %v463 = vsub.f32 %v454, %v461
    %v464 = vmul.f32 %v462, 1.442695
    %v465 = vpow.pop %v464
    %v466 = vmul.f32 %v463, 1.442695
    %v467 = vpow.pop %v466
    %v468 = vsel %vm455, %v465, 0.0
    %469 = vadd.xlane.f32.xlu0 %v468
    %v470 = vpop.xlane.xlu0 %469
    %v471 = vsel %vm455, %v467, 0.0
    %472 = vadd.xlane.f32.xlu0 %v471
    %v473 = vpop.xlane.xlu0 %472
    %v474 = vrcp.pop %v470
    %v475 = vrcp.pop %v473
    %v476 = vmul.f32 %v465, %v474
    %v477 = vmul.f32 %v467, %v475
    %v478 = vpack.c.bf16 %v477, %v476
    %v481 = vunpack.c.l.b16 %v347
    %v482 = vunpack.c.l.b16 %v348
    %v483 = vpack.c.b16 %v482, %v481
    %484 = vrot.lane.b32.xlu0 %v483, 96
    %v485 = vpop.permute.xlu0 %484
    %v487 = vsel %vm355, %v485, 0
    %489 = vmatprep.subr.bf16.mxu0 0
    %490 = vmatpush1.bf16.xpose.msra.mxu0 0
    %491 = vmatprep.subr.bf16.mxu0 0
    %492 = vmatpush1.bf16.xpose.msra.mxu0 0
    %493 = vmatprep.subr.bf16.mxu0 0
    %494 = vmatpush1.bf16.xpose.msra.mxu0 0
    %495 = vmatprep.subr.bf16.mxu0 0
    %496 = vmatpush1.bf16.xpose.msra.mxu0 0
    %497 = vmatprep.subr.bf16.mxu0 0
    %498 = vmatpush1.bf16.xpose.msra.mxu0 0
    %499 = vmatprep.subr.bf16.mxu0 0
    %500 = vmatpush1.bf16.xpose.msra.mxu0 0
    %501 = vmatprep.subr.bf16.mxu0 0
    %502 = vmatpush1.bf16.xpose.msra.mxu0 0
    %503 = vmatprep.subr.bf16.mxu0 0
    %504 = vmatpush1.bf16.xpose.msra.mxu0 %v487
    %505 = vmatprep.subr.bf16.mxu0 0
    %506 = vmatpush2.bf16.xpose.msra.mxu0 0
    %507 = vmatprep.subr.bf16.mxu0 0
    %508 = vmatpush2.bf16.xpose.msra.mxu0 0
    %509 = vmatprep.subr.bf16.mxu0 0
    %510 = vmatpush2.bf16.xpose.msra.mxu0 0
    %511 = vmatprep.subr.bf16.mxu0 0
    %512 = vmatpush2.bf16.xpose.msra.mxu0 0
    %513 = vmatprep.subr.bf16.mxu0 0
    %514 = vmatpush2.bf16.xpose.msra.mxu0 0
    %515 = vmatprep.subr.bf16.mxu0 0
    %516 = vmatpush2.bf16.xpose.msra.mxu0 0
    %517 = vmatprep.subr.bf16.mxu0 0
    %518 = vmatpush2.bf16.xpose.msra.mxu0 0
    %519 = vmatprep.subr.bf16.mxu0 0
    %520 = vmatpush2.bf16.xpose.msra.mxu0 0
    %521 = vmatprep.mubr.bf16.mxu0 0
    %522 = vmatmul.mubr.bf16.gmra.mxu0 %v357
    %v523 = vpop.f32.mrf.mxu0
    %v524 = vadd.f32 0.0, %v523
    %v525 = vpop.f32.mrf.mxu0
    %v526 = vpop.f32.mrf.mxu0
    %v527 = vadd.f32 0.0, %v526
    %v528 = vpop.f32.mrf.mxu0
    %529 = vdwg.mxu0
    %v531 = vsel %vm355, %v483, 0
    %533 = vmatprep.subr.bf16.mxu0 0
    %534 = vmatpush1.bf16.xpose.msra.mxu0 0
    %535 = vmatprep.subr.bf16.mxu0 0
    %536 = vmatpush1.bf16.xpose.msra.mxu0 0
    %537 = vmatprep.subr.bf16.mxu0 0
    %538 = vmatpush1.bf16.xpose.msra.mxu0 0
    %539 = vmatprep.subr.bf16.mxu0 0
    %540 = vmatpush1.bf16.xpose.msra.mxu0 0
    %541 = vmatprep.subr.bf16.mxu0 0
    %542 = vmatpush1.bf16.xpose.msra.mxu0 0
    %543 = vmatprep.subr.bf16.mxu0 0
    %544 = vmatpush1.bf16.xpose.msra.mxu0 0
    %545 = vmatprep.subr.bf16.mxu0 0
    %546 = vmatpush1.bf16.xpose.msra.mxu0 0
    %547 = vmatprep.subr.bf16.mxu0 0
    %548 = vmatpush1.bf16.xpose.msra.mxu0 %v531
    %549 = vmatprep.subr.bf16.mxu0 0
    %550 = vmatpush2.bf16.xpose.msra.mxu0 0
    %551 = vmatprep.subr.bf16.mxu0 0
    %552 = vmatpush2.bf16.xpose.msra.mxu0 0
    %553 = vmatprep.subr.bf16.mxu0 0
    %554 = vmatpush2.bf16.xpose.msra.mxu0 0
    %555 = vmatprep.subr.bf16.mxu0 0
    %556 = vmatpush2.bf16.xpose.msra.mxu0 0
    %557 = vmatprep.subr.bf16.mxu0 0
    %558 = vmatpush2.bf16.xpose.msra.mxu0 0
    %559 = vmatprep.subr.bf16.mxu0 0
    %560 = vmatpush2.bf16.xpose.msra.mxu0 0
    %561 = vmatprep.subr.bf16.mxu0 0
    %562 = vmatpush2.bf16.xpose.msra.mxu0 0
    %563 = vmatprep.subr.bf16.mxu0 0
    %564 = vmatpush2.bf16.xpose.msra.mxu0 0
    %565 = vmatprep.mubr.bf16.mxu0 0
    %566 = vmatmul.mubr.bf16.gmra.mxu0 %v407
    %v567 = vpop.f32.mrf.mxu0
    %v568 = vadd.f32 %v524, %v567
    %v569 = vpop.f32.mrf.mxu0
    %v570 = vpop.f32.mrf.mxu0
    %v571 = vadd.f32 %v527, %v570
    %v572 = vpop.f32.mrf.mxu0
    %573 = vdwg.mxu0
    %vm574 = vcmask 80896
    %v575 = vsel %vm574, %v568, -inf
    %576 = vmax.xlane.f32.xlu0 %v575
    %v577 = vpop.xlane.xlu0 %576
    %v578 = vsel %vm574, %v571, -inf
    %579 = vmax.xlane.f32.xlu0 %v578
    %v580 = vpop.xlane.xlu0 %579
    %v581 = vsub.f32 %v568, %v577
    %v582 = vsub.f32 %v571, %v580
    %v583 = vmul.f32 %v581, 1.442695
    %v584 = vpow.pop %v583
    %v585 = vmul.f32 %v582, 1.442695
    %v586 = vpow.pop %v585
    %v587 = vsel %vm574, %v584, 0.0
    %588 = vadd.xlane.f32.xlu0 %v587
    %v589 = vpop.xlane.xlu0 %588
    %v590 = vsel %vm574, %v586, 0.0
    %591 = vadd.xlane.f32.xlu0 %v590
    %v592 = vpop.xlane.xlu0 %591
    %v593 = vrcp.pop %v589
    %v594 = vrcp.pop %v592
    %v595 = vmul.f32 %v584, %v593
    %v596 = vmul.f32 %v586, %v594
    %v597 = vpack.c.bf16 %v596, %v595
    %598 = vrot.lane.b32.xlu0 %v483, 64
    %v599 = vpop.permute.xlu0 %598
    %v601 = vsel %vm574, %v597, 0
    %vm603 = vcmask 1044480
    %v605 = vsel %vm603, %v599, 0
    %607 = vmatprep.subr.bf16.mxu0 0
    %608 = vmatpush1.bf16.msra.mxu0 0
    %609 = vmatprep.subr.bf16.mxu0 0
    %610 = vmatpush1.bf16.msra.mxu0 0
    %611 = vmatprep.subr.bf16.mxu0 0
    %612 = vmatpush1.bf16.msra.mxu0 0
    %613 = vmatprep.subr.bf16.mxu0 0
    %614 = vmatpush1.bf16.msra.mxu0 0
    %615 = vmatprep.subr.bf16.mxu0 0
    %616 = vmatpush1.bf16.msra.mxu0 0
    %617 = vmatprep.subr.bf16.mxu0 0
    %618 = vmatpush1.bf16.msra.mxu0 0
    %619 = vmatprep.subr.bf16.mxu0 0
    %620 = vmatpush1.bf16.msra.mxu0 0
    %621 = vmatprep.subr.bf16.mxu0 0
    %622 = vmatpush1.bf16.msra.mxu0 %v605
    %623 = vmatprep.subr.bf16.mxu0 0
    %624 = vmatpush2.bf16.msra.mxu0 0
    %625 = vmatprep.subr.bf16.mxu0 0
    %626 = vmatpush2.bf16.msra.mxu0 0
    %627 = vmatprep.subr.bf16.mxu0 0
    %628 = vmatpush2.bf16.msra.mxu0 0
    %629 = vmatprep.subr.bf16.mxu0 0
    %630 = vmatpush2.bf16.msra.mxu0 0
    %631 = vmatprep.subr.bf16.mxu0 0
    %632 = vmatpush2.bf16.msra.mxu0 0
    %633 = vmatprep.subr.bf16.mxu0 0
    %634 = vmatpush2.bf16.msra.mxu0 0
    %635 = vmatprep.subr.bf16.mxu0 0
    %636 = vmatpush2.bf16.msra.mxu0 0
    %637 = vmatprep.subr.bf16.mxu0 0
    %638 = vmatpush2.bf16.msra.mxu0 0
    %639 = vmatprep.mubr.bf16.mxu0 0
    %640 = vmatmul.mubr.bf16.gmra.mxu0 %v601
    %v641 = vpop.f32.mrf.mxu0
    %v642 = vadd.f32 0.0, %v641
    %v643 = vpop.f32.mrf.mxu0
    %v644 = vpop.f32.mrf.mxu0
    %v645 = vadd.f32 0.0, %v644
    %v646 = vpop.f32.mrf.mxu0
    %647 = vdwg.mxu0
    %v648 = vstv %s346
    %v649 = vmul.f32 %v648, %v642
    %v650 = vmul.f32 %v648, %v645
    %v652 = vsel %vm455, %v478, 0
    %654 = vmatprep.subr.bf16.mxu0 0
    %655 = vmatpush1.bf16.msra.mxu0 0
    %656 = vmatprep.subr.bf16.mxu0 0
    %657 = vmatpush1.bf16.msra.mxu0 0
    %658 = vmatprep.subr.bf16.mxu0 0
    %659 = vmatpush1.bf16.msra.mxu0 0
    %660 = vmatprep.subr.bf16.mxu0 0
    %661 = vmatpush1.bf16.msra.mxu0 0
    %662 = vmatprep.subr.bf16.mxu0 0
    %663 = vmatpush1.bf16.msra.mxu0 0
    %664 = vmatprep.subr.bf16.mxu0 0
    %665 = vmatpush1.bf16.msra.mxu0 0
    %666 = vmatprep.subr.bf16.mxu0 0
    %667 = vmatpush1.bf16.msra.mxu0 0
    %668 = vmatprep.subr.bf16.mxu0 0
    %669 = vmatpush1.bf16.msra.mxu0 %v343
    %670 = vmatprep.subr.bf16.mxu0 0
    %671 = vmatpush2.bf16.msra.mxu0 0
    %672 = vmatprep.subr.bf16.mxu0 0
    %673 = vmatpush2.bf16.msra.mxu0 0
    %674 = vmatprep.subr.bf16.mxu0 0
    %675 = vmatpush2.bf16.msra.mxu0 0
    %676 = vmatprep.subr.bf16.mxu0 0
    %677 = vmatpush2.bf16.msra.mxu0 0
    %678 = vmatprep.subr.bf16.mxu0 0
    %679 = vmatpush2.bf16.msra.mxu0 0
    %680 = vmatprep.subr.bf16.mxu0 0
    %681 = vmatpush2.bf16.msra.mxu0 0
    %682 = vmatprep.subr.bf16.mxu0 0
    %683 = vmatpush2.bf16.msra.mxu0 0
    %684 = vmatprep.subr.bf16.mxu0 0
    %685 = vmatpush2.bf16.msra.mxu0 0
    %686 = vmatprep.mubr.bf16.mxu0 0
    %687 = vmatmul.mubr.bf16.gmra.mxu0 %v652
    %v688 = vpop.f32.mrf.mxu0
    %v689 = vadd.f32 %v649, %v688
    %v690 = vpop.f32.mrf.mxu0
    %v691 = vpop.f32.mrf.mxu0
    %v692 = vadd.f32 %v650, %v691
    %v693 = vpop.f32.mrf.mxu0
    %694 = vdwg.mxu0
    %695 = vrot.lane.b32.xlu0 %v288, 88
    %v696 = vpop.permute.xlu0 %695
    %697 = vrot.lane.b32.xlu0 %v342, 24
    %v698 = vpop.permute.xlu0 %697
    %v700 = vsel %vm355, %v696, 0
    %v703 = vsel %vm355, %v698, 0
    %705 = vmatprep.subr.bf16.mxu0 0
    %706 = vmatpush1.bf16.xpose.msra.mxu0 0
    %707 = vmatprep.subr.bf16.mxu0 0
    %708 = vmatpush1.bf16.xpose.msra.mxu0 0
    %709 = vmatprep.subr.bf16.mxu0 0
    %710 = vmatpush1.bf16.xpose.msra.mxu0 0
    %711 = vmatprep.subr.bf16.mxu0 0
    %712 = vmatpush1.bf16.xpose.msra.mxu0 0
    %713 = vmatprep.subr.bf16.mxu0 0
    %714 = vmatpush1.bf16.xpose.msra.mxu0 0
    %715 = vmatprep.subr.bf16.mxu0 0
    %716 = vmatpush1.bf16.xpose.msra.mxu0 0
    %717 = vmatprep.subr.bf16.mxu0 0
    %718 = vmatpush1.bf16.xpose.msra.mxu0 0
    %719 = vmatprep.subr.bf16.mxu0 0
    %720 = vmatpush1.bf16.xpose.msra.mxu0 %v703
    %721 = vmatprep.subr.bf16.mxu0 0
    %722 = vmatpush2.bf16.xpose.msra.mxu0 0
    %723 = vmatprep.subr.bf16.mxu0 0
    %724 = vmatpush2.bf16.xpose.msra.mxu0 0
    %725 = vmatprep.subr.bf16.mxu0 0
    %726 = vmatpush2.bf16.xpose.msra.mxu0 0
    %727 = vmatprep.subr.bf16.mxu0 0
    %728 = vmatpush2.bf16.xpose.msra.mxu0 0
    %729 = vmatprep.subr.bf16.mxu0 0
    %730 = vmatpush2.bf16.xpose.msra.mxu0 0
    %731 = vmatprep.subr.bf16.mxu0 0
    %732 = vmatpush2.bf16.xpose.msra.mxu0 0
    %733 = vmatprep.subr.bf16.mxu0 0
    %734 = vmatpush2.bf16.xpose.msra.mxu0 0
    %735 = vmatprep.subr.bf16.mxu0 0
    %736 = vmatpush2.bf16.xpose.msra.mxu0 0
    %737 = vmatprep.mubr.bf16.mxu0 0
    %738 = vmatmul.mubr.bf16.gmra.mxu0 %v700
    %v739 = vpop.f32.mrf.mxu0
    %v740 = vadd.f32 0.0, %v739
    %v741 = vpop.f32.mrf.mxu0
    %v742 = vpop.f32.mrf.mxu0
    %v743 = vadd.f32 0.0, %v742
    %v744 = vpop.f32.mrf.mxu0
    %745 = vdwg.mxu0
    %747 = vrot.lane.b32.xlu0 %v265, 120
    %v748 = vpop.permute.xlu0 %747
    %749 = vrot.lane.b32.xlu0 %v315, 56
    %v750 = vpop.permute.xlu0 %749
    %v752 = vsel %vm355, %v748, 0
    %v755 = vsel %vm355, %v750, 0
    %757 = vmatprep.subr.bf16.mxu0 0
    %758 = vmatpush1.bf16.xpose.msra.mxu0 0
    %759 = vmatprep.subr.bf16.mxu0 0
    %760 = vmatpush1.bf16.xpose.msra.mxu0 0
    %761 = vmatprep.subr.bf16.mxu0 0
    %762 = vmatpush1.bf16.xpose.msra.mxu0 0
    %763 = vmatprep.subr.bf16.mxu0 0
    %764 = vmatpush1.bf16.xpose.msra.mxu0 0
    %765 = vmatprep.subr.bf16.mxu0 0
    %766 = vmatpush1.bf16.xpose.msra.mxu0 0
    %767 = vmatprep.subr.bf16.mxu0 0
    %768 = vmatpush1.bf16.xpose.msra.mxu0 0
    %769 = vmatprep.subr.bf16.mxu0 0
    %770 = vmatpush1.bf16.xpose.msra.mxu0 0
    %771 = vmatprep.subr.bf16.mxu0 0
    %772 = vmatpush1.bf16.xpose.msra.mxu0 %v755
    %773 = vmatprep.subr.bf16.mxu0 0
    %774 = vmatpush2.bf16.xpose.msra.mxu0 0
    %775 = vmatprep.subr.bf16.mxu0 0
    %776 = vmatpush2.bf16.xpose.msra.mxu0 0
    %777 = vmatprep.subr.bf16.mxu0 0
    %778 = vmatpush2.bf16.xpose.msra.mxu0 0
    %779 = vmatprep.subr.bf16.mxu0 0
    %780 = vmatpush2.bf16.xpose.msra.mxu0 0
    %781 = vmatprep.subr.bf16.mxu0 0
    %782 = vmatpush2.bf16.xpose.msra.mxu0 0
    %783 = vmatprep.subr.bf16.mxu0 0
    %784 = vmatpush2.bf16.xpose.msra.mxu0 0
    %785 = vmatprep.subr.bf16.mxu0 0
    %786 = vmatpush2.bf16.xpose.msra.mxu0 0
    %787 = vmatprep.subr.bf16.mxu0 0
    %788 = vmatpush2.bf16.xpose.msra.mxu0 0
    %789 = vmatprep.mubr.bf16.mxu0 0
    %790 = vmatmul.mubr.bf16.gmra.mxu0 %v752
    %v791 = vpop.f32.mrf.mxu0
    %v792 = vadd.f32 %v740, %v791
    %v793 = vpop.f32.mrf.mxu0
    %v794 = vpop.f32.mrf.mxu0
    %v795 = vadd.f32 %v743, %v794
    %v796 = vpop.f32.mrf.mxu0
    %797 = vdwg.mxu0
    %v798 = vadd.f32 %v792, %v344
    %v799 = vadd.f32 %v795, %v345
    %v800 = vsel %vm455, %v798, -inf
    %801 = vmax.xlane.f32.xlu0 %v800
    %v802 = vpop.xlane.xlu0 %801
    %v803 = vsel %vm455, %v799, -inf
    %804 = vmax.xlane.f32.xlu0 %v803
    %v805 = vpop.xlane.xlu0 %804
    %v806 = vsub.f32 %v798, %v802
    %v807 = vsub.f32 %v799, %v805
    %v808 = vmul.f32 %v806, 1.442695
    %v809 = vpow.pop %v808
    %v810 = vmul.f32 %v807, 1.442695
    %v811 = vpow.pop %v810
    %v812 = vsel %vm455, %v809, 0.0
    %813 = vadd.xlane.f32.xlu0 %v812
    %v814 = vpop.xlane.xlu0 %813
    %v815 = vsel %vm455, %v811, 0.0
    %816 = vadd.xlane.f32.xlu0 %v815
    %v817 = vpop.xlane.xlu0 %816
    %v818 = vrcp.pop %v814
    %v819 = vrcp.pop %v817
    %v820 = vmul.f32 %v809, %v818
    %v821 = vmul.f32 %v811, %v819
    %v822 = vpack.c.bf16 %v821, %v820
    %823 = vrot.lane.b32.xlu0 %v483, 88
    %v824 = vpop.permute.xlu0 %823
    %v826 = vsel %vm355, %v824, 0
    %828 = vmatprep.subr.bf16.mxu0 0
    %829 = vmatpush1.bf16.xpose.msra.mxu0 0
    %830 = vmatprep.subr.bf16.mxu0 0
    %831 = vmatpush1.bf16.xpose.msra.mxu0 0
    %832 = vmatprep.subr.bf16.mxu0 0
    %833 = vmatpush1.bf16.xpose.msra.mxu0 0
    %834 = vmatprep.subr.bf16.mxu0 0
    %835 = vmatpush1.bf16.xpose.msra.mxu0 0
    %836 = vmatprep.subr.bf16.mxu0 0
    %837 = vmatpush1.bf16.xpose.msra.mxu0 0
    %838 = vmatprep.subr.bf16.mxu0 0
    %839 = vmatpush1.bf16.xpose.msra.mxu0 0
    %840 = vmatprep.subr.bf16.mxu0 0
    %841 = vmatpush1.bf16.xpose.msra.mxu0 0
    %842 = vmatprep.subr.bf16.mxu0 0
    %843 = vmatpush1.bf16.xpose.msra.mxu0 %v826
    %844 = vmatprep.subr.bf16.mxu0 0
    %845 = vmatpush2.bf16.xpose.msra.mxu0 0
    %846 = vmatprep.subr.bf16.mxu0 0
    %847 = vmatpush2.bf16.xpose.msra.mxu0 0
    %848 = vmatprep.subr.bf16.mxu0 0
    %849 = vmatpush2.bf16.xpose.msra.mxu0 0
    %850 = vmatprep.subr.bf16.mxu0 0
    %851 = vmatpush2.bf16.xpose.msra.mxu0 0
    %852 = vmatprep.subr.bf16.mxu0 0
    %853 = vmatpush2.bf16.xpose.msra.mxu0 0
    %854 = vmatprep.subr.bf16.mxu0 0
    %855 = vmatpush2.bf16.xpose.msra.mxu0 0
    %856 = vmatprep.subr.bf16.mxu0 0
    %857 = vmatpush2.bf16.xpose.msra.mxu0 0
    %858 = vmatprep.subr.bf16.mxu0 0
    %859 = vmatpush2.bf16.xpose.msra.mxu0 0
    %860 = vmatprep.mubr.bf16.mxu0 0
    %861 = vmatmul.mubr.bf16.gmra.mxu0 %v700
    %v862 = vpop.f32.mrf.mxu0
    %v863 = vadd.f32 0.0, %v862
    %v864 = vpop.f32.mrf.mxu0
    %v865 = vpop.f32.mrf.mxu0
    %v866 = vadd.f32 0.0, %v865
    %v867 = vpop.f32.mrf.mxu0
    %868 = vdwg.mxu0
    %869 = vrot.lane.b32.xlu0 %v483, 120
    %v870 = vpop.permute.xlu0 %869
    %v872 = vsel %vm355, %v870, 0
    %874 = vmatprep.subr.bf16.mxu0 0
    %875 = vmatpush1.bf16.xpose.msra.mxu0 0
    %876 = vmatprep.subr.bf16.mxu0 0
    %877 = vmatpush1.bf16.xpose.msra.mxu0 0
    %878 = vmatprep.subr.bf16.mxu0 0
    %879 = vmatpush1.bf16.xpose.msra.mxu0 0
    %880 = vmatprep.subr.bf16.mxu0 0
    %881 = vmatpush1.bf16.xpose.msra.mxu0 0
    %882 = vmatprep.subr.bf16.mxu0 0
    %883 = vmatpush1.bf16.xpose.msra.mxu0 0
    %884 = vmatprep.subr.bf16.mxu0 0
    %885 = vmatpush1.bf16.xpose.msra.mxu0 0
    %886 = vmatprep.subr.bf16.mxu0 0
    %887 = vmatpush1.bf16.xpose.msra.mxu0 0
    %888 = vmatprep.subr.bf16.mxu0 0
    %889 = vmatpush1.bf16.xpose.msra.mxu0 %v872
    %890 = vmatprep.subr.bf16.mxu0 0
    %891 = vmatpush2.bf16.xpose.msra.mxu0 0
    %892 = vmatprep.subr.bf16.mxu0 0
    %893 = vmatpush2.bf16.xpose.msra.mxu0 0
    %894 = vmatprep.subr.bf16.mxu0 0
    %895 = vmatpush2.bf16.xpose.msra.mxu0 0
    %896 = vmatprep.subr.bf16.mxu0 0
    %897 = vmatpush2.bf16.xpose.msra.mxu0 0
    %898 = vmatprep.subr.bf16.mxu0 0
    %899 = vmatpush2.bf16.xpose.msra.mxu0 0
    %900 = vmatprep.subr.bf16.mxu0 0
    %901 = vmatpush2.bf16.xpose.msra.mxu0 0
    %902 = vmatprep.subr.bf16.mxu0 0
    %903 = vmatpush2.bf16.xpose.msra.mxu0 0
    %904 = vmatprep.subr.bf16.mxu0 0
    %905 = vmatpush2.bf16.xpose.msra.mxu0 0
    %906 = vmatprep.mubr.bf16.mxu0 0
    %907 = vmatmul.mubr.bf16.gmra.mxu0 %v752
    %v908 = vpop.f32.mrf.mxu0
    %v909 = vadd.f32 %v863, %v908
    %v910 = vpop.f32.mrf.mxu0
    %v911 = vpop.f32.mrf.mxu0
    %v912 = vadd.f32 %v866, %v911
    %v913 = vpop.f32.mrf.mxu0
    %914 = vdwg.mxu0
    %v915 = vsel %vm574, %v909, -inf
    %916 = vmax.xlane.f32.xlu0 %v915
    %v917 = vpop.xlane.xlu0 %916
    %v918 = vsel %vm574, %v912, -inf
    %919 = vmax.xlane.f32.xlu0 %v918
    %v920 = vpop.xlane.xlu0 %919
    %v921 = vsub.f32 %v909, %v917
    %v922 = vsub.f32 %v912, %v920
    %v923 = vmul.f32 %v921, 1.442695
    %v924 = vpow.pop %v923
    %v925 = vmul.f32 %v922, 1.442695
    %v926 = vpow.pop %v925
    %v927 = vsel %vm574, %v924, 0.0
    %928 = vadd.xlane.f32.xlu0 %v927
    %v929 = vpop.xlane.xlu0 %928
    %v930 = vsel %vm574, %v926, 0.0
    %931 = vadd.xlane.f32.xlu0 %v930
    %v932 = vpop.xlane.xlu0 %931
    %v933 = vrcp.pop %v929
    %v934 = vrcp.pop %v932
    %v935 = vmul.f32 %v924, %v933
    %v936 = vmul.f32 %v926, %v934
    %v937 = vpack.c.bf16 %v936, %v935
    %938 = vrot.lane.b32.xlu0 %v483, 48
    %v939 = vpop.permute.xlu0 %938
    %v941 = vsel %vm574, %v937, 0
    %v944 = vsel %vm603, %v939, 0
    %946 = vmatprep.subr.bf16.mxu0 0
    %947 = vmatpush1.bf16.msra.mxu0 0
    %948 = vmatprep.subr.bf16.mxu0 0
    %949 = vmatpush1.bf16.msra.mxu0 0
    %950 = vmatprep.subr.bf16.mxu0 0
    %951 = vmatpush1.bf16.msra.mxu0 0
    %952 = vmatprep.subr.bf16.mxu0 0
    %953 = vmatpush1.bf16.msra.mxu0 0
    %954 = vmatprep.subr.bf16.mxu0 0
    %955 = vmatpush1.bf16.msra.mxu0 0
    %956 = vmatprep.subr.bf16.mxu0 0
    %957 = vmatpush1.bf16.msra.mxu0 0
    %958 = vmatprep.subr.bf16.mxu0 0
    %959 = vmatpush1.bf16.msra.mxu0 0
    %960 = vmatprep.subr.bf16.mxu0 0
    %961 = vmatpush1.bf16.msra.mxu0 %v944
    %962 = vmatprep.subr.bf16.mxu0 0
    %963 = vmatpush2.bf16.msra.mxu0 0
    %964 = vmatprep.subr.bf16.mxu0 0
    %965 = vmatpush2.bf16.msra.mxu0 0
    %966 = vmatprep.subr.bf16.mxu0 0
    %967 = vmatpush2.bf16.msra.mxu0 0
    %968 = vmatprep.subr.bf16.mxu0 0
    %969 = vmatpush2.bf16.msra.mxu0 0
    %970 = vmatprep.subr.bf16.mxu0 0
    %971 = vmatpush2.bf16.msra.mxu0 0
    %972 = vmatprep.subr.bf16.mxu0 0
    %973 = vmatpush2.bf16.msra.mxu0 0
    %974 = vmatprep.subr.bf16.mxu0 0
    %975 = vmatpush2.bf16.msra.mxu0 0
    %976 = vmatprep.subr.bf16.mxu0 0
    %977 = vmatpush2.bf16.msra.mxu0 0
    %978 = vmatprep.mubr.bf16.mxu0 0
    %979 = vmatmul.mubr.bf16.gmra.mxu0 %v941
    %v980 = vpop.f32.mrf.mxu0
    %v981 = vadd.f32 0.0, %v980
    %v982 = vpop.f32.mrf.mxu0
    %v983 = vpop.f32.mrf.mxu0
    %v984 = vadd.f32 0.0, %v983
    %v985 = vpop.f32.mrf.mxu0
    %986 = vdwg.mxu0
    %v987 = vmul.f32 %v648, %v981
    %v988 = vmul.f32 %v648, %v984
    %990 = vrot.lane.b32.xlu0 %v343, 112
    %v991 = vpop.permute.xlu0 %990
    %v994 = vsel %vm455, %v822, 0
    %996 = vmatprep.subr.bf16.mxu0 0
    %997 = vmatpush1.bf16.msra.mxu0 0
    %998 = vmatprep.subr.bf16.mxu0 0
    %999 = vmatpush1.bf16.msra.mxu0 0
    %1000 = vmatprep.subr.bf16.mxu0 0
    %1001 = vmatpush1.bf16.msra.mxu0 0
    %1002 = vmatprep.subr.bf16.mxu0 0
    %1003 = vmatpush1.bf16.msra.mxu0 0
    %1004 = vmatprep.subr.bf16.mxu0 0
    %1005 = vmatpush1.bf16.msra.mxu0 0
    %1006 = vmatprep.subr.bf16.mxu0 0
    %1007 = vmatpush1.bf16.msra.mxu0 0
    %1008 = vmatprep.subr.bf16.mxu0 0
    %1009 = vmatpush1.bf16.msra.mxu0 0
    %1010 = vmatprep.subr.bf16.mxu0 0
    %1011 = vmatpush1.bf16.msra.mxu0 %v991
    %1012 = vmatprep.subr.bf16.mxu0 0
    %1013 = vmatpush2.bf16.msra.mxu0 0
    %1014 = vmatprep.subr.bf16.mxu0 0
    %1015 = vmatpush2.bf16.msra.mxu0 0
    %1016 = vmatprep.subr.bf16.mxu0 0
    %1017 = vmatpush2.bf16.msra.mxu0 0
    %1018 = vmatprep.subr.bf16.mxu0 0
    %1019 = vmatpush2.bf16.msra.mxu0 0
    %1020 = vmatprep.subr.bf16.mxu0 0
    %1021 = vmatpush2.bf16.msra.mxu0 0
    %1022 = vmatprep.subr.bf16.mxu0 0
    %1023 = vmatpush2.bf16.msra.mxu0 0
    %1024 = vmatprep.subr.bf16.mxu0 0
    %1025 = vmatpush2.bf16.msra.mxu0 0
    %1026 = vmatprep.subr.bf16.mxu0 0
    %1027 = vmatpush2.bf16.msra.mxu0 0
    %1028 = vmatprep.mubr.bf16.mxu0 0
    %1029 = vmatmul.mubr.bf16.gmra.mxu0 %v994
    %v1030 = vpop.f32.mrf.mxu0
    %v1031 = vadd.f32 %v987, %v1030
    %v1032 = vpop.f32.mrf.mxu0
    %v1033 = vpop.f32.mrf.mxu0
    %v1034 = vadd.f32 %v988, %v1033
    %v1035 = vpop.f32.mrf.mxu0
    %1036 = vdwg.mxu0
    %1037 = vrot.lane.b32.xlu0 %v288, 80
    %v1038 = vpop.permute.xlu0 %1037
    %1039 = vrot.lane.b32.xlu0 %v342, 16
    %v1040 = vpop.permute.xlu0 %1039
    %v1042 = vsel %vm355, %v1038, 0
    %v1045 = vsel %vm355, %v1040, 0
    %1047 = vmatprep.subr.bf16.mxu0 0
    %1048 = vmatpush1.bf16.xpose.msra.mxu0 0
    %1049 = vmatprep.subr.bf16.mxu0 0
    %1050 = vmatpush1.bf16.xpose.msra.mxu0 0
    %1051 = vmatprep.subr.bf16.mxu0 0
    %1052 = vmatpush1.bf16.xpose.msra.mxu0 0
    %1053 = vmatprep.subr.bf16.mxu0 0
    %1054 = vmatpush1.bf16.xpose.msra.mxu0 0
    %1055 = vmatprep.subr.bf16.mxu0 0
    %1056 = vmatpush1.bf16.xpose.msra.mxu0 0
    %1057 = vmatprep.subr.bf16.mxu0 0
    %1058 = vmatpush1.bf16.xpose.msra.mxu0 0
    %1059 = vmatprep.subr.bf16.mxu0 0
    %1060 = vmatpush1.bf16.xpose.msra.mxu0 0
    %1061 = vmatprep.subr.bf16.mxu0 0
    %1062 = vmatpush1.bf16.xpose.msra.mxu0 %v1045
    %1063 = vmatprep.subr.bf16.mxu0 0
    %1064 = vmatpush2.bf16.xpose.msra.mxu0 0
    %1065 = vmatprep.subr.bf16.mxu0 0
    %1066 = vmatpush2.bf16.xpose.msra.mxu0 0
    %1067 = vmatprep.subr.bf16.mxu0 0
    %1068 = vmatpush2.bf16.xpose.msra.mxu0 0
    %1069 = vmatprep.subr.bf16.mxu0 0
    %1070 = vmatpush2.bf16.xpose.msra.mxu0 0
    %1071 = vmatprep.subr.bf16.mxu0 0
    %1072 = vmatpush2.bf16.xpose.msra.mxu0 0
    %1073 = vmatprep.subr.bf16.mxu0 0
    %1074 = vmatpush2.bf16.xpose.msra.mxu0 0
    %1075 = vmatprep.subr.bf16.mxu0 0
    %1076 = vmatpush2.bf16.xpose.msra.mxu0 0
    %1077 = vmatprep.subr.bf16.mxu0 0
    %1078 = vmatpush2.bf16.xpose.msra.mxu0 0
    %1079 = vmatprep.mubr.bf16.mxu0 0
    %1080 = vmatmul.mubr.bf16.gmra.mxu0 %v1042
    %v1081 = vpop.f32.mrf.mxu0
    %v1082 = vadd.f32 0.0, %v1081
    %v1083 = vpop.f32.mrf.mxu0
    %v1084 = vpop.f32.mrf.mxu0
    %v1085 = vadd.f32 0.0, %v1084
    %v1086 = vpop.f32.mrf.mxu0
    %1087 = vdwg.mxu0
    %1088 = vrot.lane.b32.xlu0 %v265, 112
    %v1089 = vpop.permute.xlu0 %1088
    %1090 = vrot.lane.b32.xlu0 %v315, 48
    %v1091 = vpop.permute.xlu0 %1090
    %v1093 = vsel %vm355, %v1089, 0
    %v1096 = vsel %vm355, %v1091, 0
    %1098 = vmatprep.subr.bf16.mxu0 0
    %1099 = vmatpush1.bf16.xpose.msra.mxu0 0
    %1100 = vmatprep.subr.bf16.mxu0 0
    %1101 = vmatpush1.bf16.xpose.msra.mxu0 0
    %1102 = vmatprep.subr.bf16.mxu0 0
    %1103 = vmatpush1.bf16.xpose.msra.mxu0 0
    %1104 = vmatprep.subr.bf16.mxu0 0
    %1105 = vmatpush1.bf16.xpose.msra.mxu0 0
    %1106 = vmatprep.subr.bf16.mxu0 0
    %1107 = vmatpush1.bf16.xpose.msra.mxu0 0
    %1108 = vmatprep.subr.bf16.mxu0 0
    %1109 = vmatpush1.bf16.xpose.msra.mxu0 0
    %1110 = vmatprep.subr.bf16.mxu0 0
    %1111 = vmatpush1.bf16.xpose.msra.mxu0 0
    %1112 = vmatprep.subr.bf16.mxu0 0
    %1113 = vmatpush1.bf16.xpose.msra.mxu0 %v1096
    %1114 = vmatprep.subr.bf16.mxu0 0
    %1115 = vmatpush2.bf16.xpose.msra.mxu0 0
    %1116 = vmatprep.subr.bf16.mxu0 0
    %1117 = vmatpush2.bf16.xpose.msra.mxu0 0
    %1118 = vmatprep.subr.bf16.mxu0 0
    %1119 = vmatpush2.bf16.xpose.msra.mxu0 0
    %1120 = vmatprep.subr.bf16.mxu0 0
    %1121 = vmatpush2.bf16.xpose.msra.mxu0 0
    %1122 = vmatprep.subr.bf16.mxu0 0
    %1123 = vmatpush2.bf16.xpose.msra.mxu0 0
    %1124 = vmatprep.subr.bf16.mxu0 0
    %1125 = vmatpush2.bf16.xpose.msra.mxu0 0
    %1126 = vmatprep.subr.bf16.mxu0 0
    %1127 = vmatpush2.bf16.xpose.msra.mxu0 0
    %1128 = vmatprep.subr.bf16.mxu0 0
    %1129 = vmatpush2.bf16.xpose.msra.mxu0 0
    %1130 = vmatprep.mubr.bf16.mxu0 0
    %1131 = vmatmul.mubr.bf16.gmra.mxu0 %v1093
    %v1132 = vpop.f32.mrf.mxu0
    %v1133 = vadd.f32 %v1082, %v1132
    %v1134 = vpop.f32.mrf.mxu0
    %v1135 = vpop.f32.mrf.mxu0
    %v1136 = vadd.f32 %v1085, %v1135
    %v1137 = vpop.f32.mrf.mxu0
    %1138 = vdwg.mxu0
    %v1139 = vadd.f32 %v1133, %v344
    %v1140 = vadd.f32 %v1136, %v345
    %v1141 = vsel %vm455, %v1139, -inf
    %1142 = vmax.xlane.f32.xlu0 %v1141
    %v1143 = vpop.xlane.xlu0 %1142
    %v1144 = vsel %vm455, %v1140, -inf
    %1145 = vmax.xlane.f32.xlu0 %v1144
    %v1146 = vpop.xlane.xlu0 %1145
    %v1147 = vsub.f32 %v1139, %v1143
    %v1148 = vsub.f32 %v1140, %v1146
    %v1149 = vmul.f32 %v1147, 1.442695
    %v1150 = vpow.pop %v1149
    %v1151 = vmul.f32 %v1148, 1.442695
    %v1152 = vpow.pop %v1151
    %v1153 = vsel %vm455, %v1150, 0.0
    %1154 = vadd.xlane.f32.xlu0 %v1153
    %v1155 = vpop.xlane.xlu0 %1154
    %v1156 = vsel %vm455, %v1152, 0.0
    %1157 = vadd.xlane.f32.xlu0 %v1156
    %v1158 = vpop.xlane.xlu0 %1157
    %v1159 = vrcp.pop %v1155
    %v1160 = vrcp.pop %v1158
    %v1161 = vmul.f32 %v1150, %v1159
    %v1162 = vmul.f32 %v1152, %v1160
    %v1163 = vpack.c.bf16 %v1162, %v1161
    %1164 = vrot.lane.b32.xlu0 %v483, 80
    %v1165 = vpop.permute.xlu0 %1164
    %v1167 = vsel %vm355, %v1165, 0
    %1169 = vmatprep.subr.bf16.mxu0 0
    %1170 = vmatpush1.bf16.xpose.msra.mxu0 0
    %1171 = vmatprep.subr.bf16.mxu0 0
    %1172 = vmatpush1.bf16.xpose.msra.mxu0 0
    %1173 = vmatprep.subr.bf16.mxu0 0
    %1174 = vmatpush1.bf16.xpose.msra.mxu0 0
    %1175 = vmatprep.subr.bf16.mxu0 0
    %1176 = vmatpush1.bf16.xpose.msra.mxu0 0
    %1177 = vmatprep.subr.bf16.mxu0 0
    %1178 = vmatpush1.bf16.xpose.msra.mxu0 0
    %1179 = vmatprep.subr.bf16.mxu0 0
    %1180 = vmatpush1.bf16.xpose.msra.mxu0 0
    %1181 = vmatprep.subr.bf16.mxu0 0
    %1182 = vmatpush1.bf16.xpose.msra.mxu0 0
    %1183 = vmatprep.subr.bf16.mxu0 0
    %1184 = vmatpush1.bf16.xpose.msra.mxu0 %v1167
    %1185 = vmatprep.subr.bf16.mxu0 0
    %1186 = vmatpush2.bf16.xpose.msra.mxu0 0
    %1187 = vmatprep.subr.bf16.mxu0 0
    %1188 = vmatpush2.bf16.xpose.msra.mxu0 0
    %1189 = vmatprep.subr.bf16.mxu0 0
    %1190 = vmatpush2.bf16.xpose.msra.mxu0 0
    %1191 = vmatprep.subr.bf16.mxu0 0
    %1192 = vmatpush2.bf16.xpose.msra.mxu0 0
    %1193 = vmatprep.subr.bf16.mxu0 0
    %1194 = vmatpush2.bf16.xpose.msra.mxu0 0
    %1195 = vmatprep.subr.bf16.mxu0 0
    %1196 = vmatpush2.bf16.xpose.msra.mxu0 0
    %1197 = vmatprep.subr.bf16.mxu0 0
    %1198 = vmatpush2.bf16.xpose.msra.mxu0 0
    %1199 = vmatprep.subr.bf16.mxu0 0
    %1200 = vmatpush2.bf16.xpose.msra.mxu0 0
    %1201 = vmatprep.mubr.bf16.mxu0 0
    %1202 = vmatmul.mubr.bf16.gmra.mxu0 %v1042
    %v1203 = vpop.f32.mrf.mxu0
    %v1204 = vadd.f32 0.0, %v1203
    %v1205 = vpop.f32.mrf.mxu0
    %v1206 = vpop.f32.mrf.mxu0
    %v1207 = vadd.f32 0.0, %v1206
    %v1208 = vpop.f32.mrf.mxu0
    %1209 = vdwg.mxu0
    %1210 = vrot.lane.b32.xlu0 %v483, 112
    %v1211 = vpop.permute.xlu0 %1210
    %v1213 = vsel %vm355, %v1211, 0
    %1215 = vmatprep.subr.bf16.mxu0 0
    %1216 = vmatpush1.bf16.xpose.msra.mxu0 0
    %1217 = vmatprep.subr.bf16.mxu0 0
    %1218 = vmatpush1.bf16.xpose.msra.mxu0 0
    %1219 = vmatprep.subr.bf16.mxu0 0
    %1220 = vmatpush1.bf16.xpose.msra.mxu0 0
    %1221 = vmatprep.subr.bf16.mxu0 0
    %1222 = vmatpush1.bf16.xpose.msra.mxu0 0
    %1223 = vmatprep.subr.bf16.mxu0 0
    %1224 = vmatpush1.bf16.xpose.msra.mxu0 0
    %1225 = vmatprep.subr.bf16.mxu0 0
    %1226 = vmatpush1.bf16.xpose.msra.mxu0 0
    %1227 = vmatprep.subr.bf16.mxu0 0
    %1228 = vmatpush1.bf16.xpose.msra.mxu0 0
    %1229 = vmatprep.subr.bf16.mxu0 0
    %1230 = vmatpush1.bf16.xpose.msra.mxu0 %v1213
    %1231 = vmatprep.subr.bf16.mxu0 0
    %1232 = vmatpush2.bf16.xpose.msra.mxu0 0
    %1233 = vmatprep.subr.bf16.mxu0 0
    %1234 = vmatpush2.bf16.xpose.msra.mxu0 0
    %1235 = vmatprep.subr.bf16.mxu0 0
    %1236 = vmatpush2.bf16.xpose.msra.mxu0 0
    %1237 = vmatprep.subr.bf16.mxu0 0
    %1238 = vmatpush2.bf16.xpose.msra.mxu0 0
    %1239 = vmatprep.subr.bf16.mxu0 0
    %1240 = vmatpush2.bf16.xpose.msra.mxu0 0
    %1241 = vmatprep.subr.bf16.mxu0 0
    %1242 = vmatpush2.bf16.xpose.msra.mxu0 0
    %1243 = vmatprep.subr.bf16.mxu0 0
    %1244 = vmatpush2.bf16.xpose.msra.mxu0 0
    %1245 = vmatprep.subr.bf16.mxu0 0
    %1246 = vmatpush2.bf16.xpose.msra.mxu0 0
    %1247 = vmatprep.mubr.bf16.mxu0 0
    %1248 = vmatmul.mubr.bf16.gmra.mxu0 %v1093
    %v1249 = vpop.f32.mrf.mxu0
    %v1250 = vadd.f32 %v1204, %v1249
    %v1251 = vpop.f32.mrf.mxu0
    %v1252 = vpop.f32.mrf.mxu0
    %v1253 = vadd.f32 %v1207, %v1252
    %v1254 = vpop.f32.mrf.mxu0
    %1255 = vdwg.mxu0
    %v1256 = vsel %vm574, %v1250, -inf
    %1257 = vmax.xlane.f32.xlu0 %v1256
    %v1258 = vpop.xlane.xlu0 %1257
    %v1259 = vsel %vm574, %v1253, -inf
    %1260 = vmax.xlane.f32.xlu0 %v1259
    %v1261 = vpop.xlane.xlu0 %1260
    %v1262 = vsub.f32 %v1250, %v1258
    %v1263 = vsub.f32 %v1253, %v1261
    %v1264 = vmul.f32 %v1262, 1.442695
    %v1265 = vpow.pop %v1264
    %v1266 = vmul.f32 %v1263, 1.442695
    %v1267 = vpow.pop %v1266
    %v1268 = vsel %vm574, %v1265, 0.0
    %1269 = vadd.xlane.f32.xlu0 %v1268
    %v1270 = vpop.xlane.xlu0 %1269
    %v1271 = vsel %vm574, %v1267, 0.0
    %1272 = vadd.xlane.f32.xlu0 %v1271
    %v1273 = vpop.xlane.xlu0 %1272
    %v1274 = vrcp.pop %v1270
    %v1275 = vrcp.pop %v1273
    %v1276 = vmul.f32 %v1265, %v1274
    %v1277 = vmul.f32 %v1267, %v1275
    %v1278 = vpack.c.bf16 %v1277, %v1276
    %1279 = vrot.lane.b32.xlu0 %v483, 32
    %v1280 = vpop.permute.xlu0 %1279
    %v1282 = vsel %vm574, %v1278, 0
    %v1285 = vsel %vm603, %v1280, 0
    %1287 = vmatprep.subr.bf16.mxu0 0
    %1288 = vmatpush1.bf16.msra.mxu0 0
    %1289 = vmatprep.subr.bf16.mxu0 0
    %1290 = vmatpush1.bf16.msra.mxu0 0
    %1291 = vmatprep.subr.bf16.mxu0 0
    %1292 = vmatpush1.bf16.msra.mxu0 0
    %1293 = vmatprep.subr.bf16.mxu0 0
    %1294 = vmatpush1.bf16.msra.mxu0 0
    %1295 = vmatprep.subr.bf16.mxu0 0
    %1296 = vmatpush1.bf16.msra.mxu0 0
    %1297 = vmatprep.subr.bf16.mxu0 0
    %1298 = vmatpush1.bf16.msra.mxu0 0
    %1299 = vmatprep.subr.bf16.mxu0 0
    %1300 = vmatpush1.bf16.msra.mxu0 0
    %1301 = vmatprep.subr.bf16.mxu0 0
    %1302 = vmatpush1.bf16.msra.mxu0 %v1285
    %1303 = vmatprep.subr.bf16.mxu0 0
    %1304 = vmatpush2.bf16.msra.mxu0 0
    %1305 = vmatprep.subr.bf16.mxu0 0
    %1306 = vmatpush2.bf16.msra.mxu0 0
    %1307 = vmatprep.subr.bf16.mxu0 0
    %1308 = vmatpush2.bf16.msra.mxu0 0
    %1309 = vmatprep.subr.bf16.mxu0 0
    %1310 = vmatpush2.bf16.msra.mxu0 0
    %1311 = vmatprep.subr.bf16.mxu0 0
    %1312 = vmatpush2.bf16.msra.mxu0 0
    %1313 = vmatprep.subr.bf16.mxu0 0
    %1314 = vmatpush2.bf16.msra.mxu0 0
    %1315 = vmatprep.subr.bf16.mxu0 0
    %1316 = vmatpush2.bf16.msra.mxu0 0
    %1317 = vmatprep.subr.bf16.mxu0 0
    %1318 = vmatpush2.bf16.msra.mxu0 0
    %1319 = vmatprep.mubr.bf16.mxu0 0
    %1320 = vmatmul.mubr.bf16.gmra.mxu0 %v1282
    %v1321 = vpop.f32.mrf.mxu0
    %v1322 = vadd.f32 0.0, %v1321
    %v1323 = vpop.f32.mrf.mxu0
    %v1324 = vpop.f32.mrf.mxu0
    %v1325 = vadd.f32 0.0, %v1324
    %v1326 = vpop.f32.mrf.mxu0
    %1327 = vdwg.mxu0
    %v1328 = vmul.f32 %v648, %v1322
    %v1329 = vmul.f32 %v648, %v1325
    %1330 = vrot.lane.b32.xlu0 %v343, 96
    %v1331 = vpop.permute.xlu0 %1330
    %v1334 = vsel %vm455, %v1163, 0
    %1336 = vmatprep.subr.bf16.mxu0 0
    %1337 = vmatpush1.bf16.msra.mxu0 0
    %1338 = vmatprep.subr.bf16.mxu0 0
    %1339 = vmatpush1.bf16.msra.mxu0 0
    %1340 = vmatprep.subr.bf16.mxu0 0
    %1341 = vmatpush1.bf16.msra.mxu0 0
    %1342 = vmatprep.subr.bf16.mxu0 0
    %1343 = vmatpush1.bf16.msra.mxu0 0
    %1344 = vmatprep.subr.bf16.mxu0 0
    %1345 = vmatpush1.bf16.msra.mxu0 0
    %1346 = vmatprep.subr.bf16.mxu0 0
    %1347 = vmatpush1.bf16.msra.mxu0 0
    %1348 = vmatprep.subr.bf16.mxu0 0
    %1349 = vmatpush1.bf16.msra.mxu0 0
    %1350 = vmatprep.subr.bf16.mxu0 0
    %1351 = vmatpush1.bf16.msra.mxu0 %v1331
    %1352 = vmatprep.subr.bf16.mxu0 0
    %1353 = vmatpush2.bf16.msra.mxu0 0
    %1354 = vmatprep.subr.bf16.mxu0 0
    %1355 = vmatpush2.bf16.msra.mxu0 0
    %1356 = vmatprep.subr.bf16.mxu0 0
    %1357 = vmatpush2.bf16.msra.mxu0 0
    %1358 = vmatprep.subr.bf16.mxu0 0
    %1359 = vmatpush2.bf16.msra.mxu0 0
    %1360 = vmatprep.subr.bf16.mxu0 0
    %1361 = vmatpush2.bf16.msra.mxu0 0
    %1362 = vmatprep.subr.bf16.mxu0 0
    %1363 = vmatpush2.bf16.msra.mxu0 0
    %1364 = vmatprep.subr.bf16.mxu0 0
    %1365 = vmatpush2.bf16.msra.mxu0 0
    %1366 = vmatprep.subr.bf16.mxu0 0
    %1367 = vmatpush2.bf16.msra.mxu0 0
    %1368 = vmatprep.mubr.bf16.mxu0 0
    %1369 = vmatmul.mubr.bf16.gmra.mxu0 %v1334
    %v1370 = vpop.f32.mrf.mxu0
    %v1371 = vadd.f32 %v1328, %v1370
    %v1372 = vpop.f32.mrf.mxu0
    %v1373 = vpop.f32.mrf.mxu0
    %v1374 = vadd.f32 %v1329, %v1373
    %v1375 = vpop.f32.mrf.mxu0
    %1376 = vdwg.mxu0
    %1377 = vrot.lane.b32.xlu0 %v288, 72
    %v1378 = vpop.permute.xlu0 %1377
    %1379 = vrot.lane.b32.xlu0 %v342, 8
    %v1380 = vpop.permute.xlu0 %1379
    %v1382 = vsel %vm355, %v1378, 0
    %v1385 = vsel %vm355, %v1380, 0
    %1387 = vmatprep.subr.bf16.mxu0 0
    %1388 = vmatpush1.bf16.xpose.msra.mxu0 0
    %1389 = vmatprep.subr.bf16.mxu0 0
    %1390 = vmatpush1.bf16.xpose.msra.mxu0 0
    %1391 = vmatprep.subr.bf16.mxu0 0
    %1392 = vmatpush1.bf16.xpose.msra.mxu0 0
    %1393 = vmatprep.subr.bf16.mxu0 0
    %1394 = vmatpush1.bf16.xpose.msra.mxu0 0
    %1395 = vmatprep.subr.bf16.mxu0 0
    %1396 = vmatpush1.bf16.xpose.msra.mxu0 0
    %1397 = vmatprep.subr.bf16.mxu0 0
    %1398 = vmatpush1.bf16.xpose.msra.mxu0 0
    %1399 = vmatprep.subr.bf16.mxu0 0
    %1400 = vmatpush1.bf16.xpose.msra.mxu0 0
    %1401 = vmatprep.subr.bf16.mxu0 0
    %1402 = vmatpush1.bf16.xpose.msra.mxu0 %v1385
    %1403 = vmatprep.subr.bf16.mxu0 0
    %1404 = vmatpush2.bf16.xpose.msra.mxu0 0
    %1405 = vmatprep.subr.bf16.mxu0 0
    %1406 = vmatpush2.bf16.xpose.msra.mxu0 0
    %1407 = vmatprep.subr.bf16.mxu0 0
    %1408 = vmatpush2.bf16.xpose.msra.mxu0 0
    %1409 = vmatprep.subr.bf16.mxu0 0
    %1410 = vmatpush2.bf16.xpose.msra.mxu0 0
    %1411 = vmatprep.subr.bf16.mxu0 0
    %1412 = vmatpush2.bf16.xpose.msra.mxu0 0
    %1413 = vmatprep.subr.bf16.mxu0 0
    %1414 = vmatpush2.bf16.xpose.msra.mxu0 0
    %1415 = vmatprep.subr.bf16.mxu0 0
    %1416 = vmatpush2.bf16.xpose.msra.mxu0 0
    %1417 = vmatprep.subr.bf16.mxu0 0
    %1418 = vmatpush2.bf16.xpose.msra.mxu0 0
    %1419 = vmatprep.mubr.bf16.mxu0 0
    %1420 = vmatmul.mubr.bf16.gmra.mxu0 %v1382
    %v1421 = vpop.f32.mrf.mxu0
    %v1422 = vadd.f32 0.0, %v1421
    %v1423 = vpop.f32.mrf.mxu0
    %v1424 = vpop.f32.mrf.mxu0
    %v1425 = vadd.f32 0.0, %v1424
    %v1426 = vpop.f32.mrf.mxu0
    %1427 = vdwg.mxu0
    %1428 = vrot.lane.b32.xlu0 %v265, 104
    %v1429 = vpop.permute.xlu0 %1428
    %1430 = vrot.lane.b32.xlu0 %v315, 40
    %v1431 = vpop.permute.xlu0 %1430
    %v1433 = vsel %vm355, %v1429, 0
    %v1436 = vsel %vm355, %v1431, 0
    %1438 = vmatprep.subr.bf16.mxu0 0
    %1439 = vmatpush1.bf16.xpose.msra.mxu0 0
    %1440 = vmatprep.subr.bf16.mxu0 0
    %1441 = vmatpush1.bf16.xpose.msra.mxu0 0
    %1442 = vmatprep.subr.bf16.mxu0 0
    %1443 = vmatpush1.bf16.xpose.msra.mxu0 0
    %1444 = vmatprep.subr.bf16.mxu0 0
    %1445 = vmatpush1.bf16.xpose.msra.mxu0 0
    %1446 = vmatprep.subr.bf16.mxu0 0
    %1447 = vmatpush1.bf16.xpose.msra.mxu0 0
    %1448 = vmatprep.subr.bf16.mxu0 0
    %1449 = vmatpush1.bf16.xpose.msra.mxu0 0
    %1450 = vmatprep.subr.bf16.mxu0 0
    %1451 = vmatpush1.bf16.xpose.msra.mxu0 0
    %1452 = vmatprep.subr.bf16.mxu0 0
    %1453 = vmatpush1.bf16.xpose.msra.mxu0 %v1436
    %1454 = vmatprep.subr.bf16.mxu0 0
    %1455 = vmatpush2.bf16.xpose.msra.mxu0 0
    %1456 = vmatprep.subr.bf16.mxu0 0
    %1457 = vmatpush2.bf16.xpose.msra.mxu0 0
    %1458 = vmatprep.subr.bf16.mxu0 0
    %1459 = vmatpush2.bf16.xpose.msra.mxu0 0
    %1460 = vmatprep.subr.bf16.mxu0 0
    %1461 = vmatpush2.bf16.xpose.msra.mxu0 0
    %1462 = vmatprep.subr.bf16.mxu0 0
    %1463 = vmatpush2.bf16.xpose.msra.mxu0 0
    %1464 = vmatprep.subr.bf16.mxu0 0
    %1465 = vmatpush2.bf16.xpose.msra.mxu0 0
    %1466 = vmatprep.subr.bf16.mxu0 0
    %1467 = vmatpush2.bf16.xpose.msra.mxu0 0
    %1468 = vmatprep.subr.bf16.mxu0 0
    %1469 = vmatpush2.bf16.xpose.msra.mxu0 0
    %1470 = vmatprep.mubr.bf16.mxu0 0
    %1471 = vmatmul.mubr.bf16.gmra.mxu0 %v1433
    %v1472 = vpop.f32.mrf.mxu0
    %v1473 = vadd.f32 %v1422, %v1472
    %v1474 = vpop.f32.mrf.mxu0
    %v1475 = vpop.f32.mrf.mxu0
    %v1476 = vadd.f32 %v1425, %v1475
    %v1477 = vpop.f32.mrf.mxu0
    %1478 = vdwg.mxu0
    %v1479 = vadd.f32 %v1473, %v344
    %v1480 = vadd.f32 %v1476, %v345
    %v1481 = vsel %vm455, %v1479, -inf
    %1482 = vmax.xlane.f32.xlu0 %v1481
    %v1483 = vpop.xlane.xlu0 %1482
    %v1484 = vsel %vm455, %v1480, -inf
    %1485 = vmax.xlane.f32.xlu0 %v1484
    %v1486 = vpop.xlane.xlu0 %1485
    %v1487 = vsub.f32 %v1479, %v1483
    %v1488 = vsub.f32 %v1480, %v1486
    %v1489 = vmul.f32 %v1487, 1.442695
    %v1490 = vpow.pop %v1489
    %v1491 = vmul.f32 %v1488, 1.442695
    %v1492 = vpow.pop %v1491
    %v1493 = vsel %vm455, %v1490, 0.0
    %1494 = vadd.xlane.f32.xlu0 %v1493
    %v1495 = vpop.xlane.xlu0 %1494
    %v1496 = vsel %vm455, %v1492, 0.0
    %1497 = vadd.xlane.f32.xlu0 %v1496
    %v1498 = vpop.xlane.xlu0 %1497
    %v1499 = vrcp.pop %v1495
    %v1500 = vrcp.pop %v1498
    %v1501 = vmul.f32 %v1490, %v1499
    %v1502 = vmul.f32 %v1492, %v1500
    %v1503 = vpack.c.bf16 %v1502, %v1501
    %1504 = vrot.lane.b32.xlu0 %v483, 72
    %v1505 = vpop.permute.xlu0 %1504
    %v1507 = vsel %vm355, %v1505, 0
    %1509 = vmatprep.subr.bf16.mxu0 0
    %1510 = vmatpush1.bf16.xpose.msra.mxu0 0
    %1511 = vmatprep.subr.bf16.mxu0 0
    %1512 = vmatpush1.bf16.xpose.msra.mxu0 0
    %1513 = vmatprep.subr.bf16.mxu0 0
    %1514 = vmatpush1.bf16.xpose.msra.mxu0 0
    %1515 = vmatprep.subr.bf16.mxu0 0
    %1516 = vmatpush1.bf16.xpose.msra.mxu0 0
    %1517 = vmatprep.subr.bf16.mxu0 0
    %1518 = vmatpush1.bf16.xpose.msra.mxu0 0
    %1519 = vmatprep.subr.bf16.mxu0 0
    %1520 = vmatpush1.bf16.xpose.msra.mxu0 0
    %1521 = vmatprep.subr.bf16.mxu0 0
    %1522 = vmatpush1.bf16.xpose.msra.mxu0 0
    %1523 = vmatprep.subr.bf16.mxu0 0
    %1524 = vmatpush1.bf16.xpose.msra.mxu0 %v1507
    %1525 = vmatprep.subr.bf16.mxu0 0
    %1526 = vmatpush2.bf16.xpose.msra.mxu0 0
    %1527 = vmatprep.subr.bf16.mxu0 0
    %1528 = vmatpush2.bf16.xpose.msra.mxu0 0
    %1529 = vmatprep.subr.bf16.mxu0 0
    %1530 = vmatpush2.bf16.xpose.msra.mxu0 0
    %1531 = vmatprep.subr.bf16.mxu0 0
    %1532 = vmatpush2.bf16.xpose.msra.mxu0 0
    %1533 = vmatprep.subr.bf16.mxu0 0
    %1534 = vmatpush2.bf16.xpose.msra.mxu0 0
    %1535 = vmatprep.subr.bf16.mxu0 0
    %1536 = vmatpush2.bf16.xpose.msra.mxu0 0
    %1537 = vmatprep.subr.bf16.mxu0 0
    %1538 = vmatpush2.bf16.xpose.msra.mxu0 0
    %1539 = vmatprep.subr.bf16.mxu0 0
    %1540 = vmatpush2.bf16.xpose.msra.mxu0 0
    %1541 = vmatprep.mubr.bf16.mxu0 0
    %1542 = vmatmul.mubr.bf16.gmra.mxu0 %v1382
    %v1543 = vpop.f32.mrf.mxu0
    %v1544 = vadd.f32 0.0, %v1543
    %v1545 = vpop.f32.mrf.mxu0
    %v1546 = vpop.f32.mrf.mxu0
    %v1547 = vadd.f32 0.0, %v1546
    %v1548 = vpop.f32.mrf.mxu0
    %1549 = vdwg.mxu0
    %1550 = vrot.lane.b32.xlu0 %v483, 104
    %v1551 = vpop.permute.xlu0 %1550
    %v1553 = vsel %vm355, %v1551, 0
    %1555 = vmatprep.subr.bf16.mxu0 0
    %1556 = vmatpush1.bf16.xpose.msra.mxu0 0
    %1557 = vmatprep.subr.bf16.mxu0 0
    %1558 = vmatpush1.bf16.xpose.msra.mxu0 0
    %1559 = vmatprep.subr.bf16.mxu0 0
    %1560 = vmatpush1.bf16.xpose.msra.mxu0 0
    %1561 = vmatprep.subr.bf16.mxu0 0
    %1562 = vmatpush1.bf16.xpose.msra.mxu0 0
    %1563 = vmatprep.subr.bf16.mxu0 0
    %1564 = vmatpush1.bf16.xpose.msra.mxu0 0
    %1565 = vmatprep.subr.bf16.mxu0 0
    %1566 = vmatpush1.bf16.xpose.msra.mxu0 0
    %1567 = vmatprep.subr.bf16.mxu0 0
    %1568 = vmatpush1.bf16.xpose.msra.mxu0 0
    %1569 = vmatprep.subr.bf16.mxu0 0
    %1570 = vmatpush1.bf16.xpose.msra.mxu0 %v1553
    %1571 = vmatprep.subr.bf16.mxu0 0
    %1572 = vmatpush2.bf16.xpose.msra.mxu0 0
    %1573 = vmatprep.subr.bf16.mxu0 0
    %1574 = vmatpush2.bf16.xpose.msra.mxu0 0
    %1575 = vmatprep.subr.bf16.mxu0 0
    %1576 = vmatpush2.bf16.xpose.msra.mxu0 0
    %1577 = vmatprep.subr.bf16.mxu0 0
    %1578 = vmatpush2.bf16.xpose.msra.mxu0 0
    %1579 = vmatprep.subr.bf16.mxu0 0
    %1580 = vmatpush2.bf16.xpose.msra.mxu0 0
    %1581 = vmatprep.subr.bf16.mxu0 0
    %1582 = vmatpush2.bf16.xpose.msra.mxu0 0
    %1583 = vmatprep.subr.bf16.mxu0 0
    %1584 = vmatpush2.bf16.xpose.msra.mxu0 0
    %1585 = vmatprep.subr.bf16.mxu0 0
    %1586 = vmatpush2.bf16.xpose.msra.mxu0 0
    %1587 = vmatprep.mubr.bf16.mxu0 0
    %1588 = vmatmul.mubr.bf16.gmra.mxu0 %v1433
    %v1589 = vpop.f32.mrf.mxu0
    %v1590 = vadd.f32 %v1544, %v1589
    %v1591 = vpop.f32.mrf.mxu0
    %v1592 = vpop.f32.mrf.mxu0
    %v1593 = vadd.f32 %v1547, %v1592
    %v1594 = vpop.f32.mrf.mxu0
    %1595 = vdwg.mxu0
    %v1596 = vsel %vm574, %v1590, -inf
    %1597 = vmax.xlane.f32.xlu0 %v1596
    %v1598 = vpop.xlane.xlu0 %1597
    %v1599 = vsel %vm574, %v1593, -inf
    %1600 = vmax.xlane.f32.xlu0 %v1599
    %v1601 = vpop.xlane.xlu0 %1600
    %v1602 = vsub.f32 %v1590, %v1598
    %v1603 = vsub.f32 %v1593, %v1601
    %v1604 = vmul.f32 %v1602, 1.442695
    %v1605 = vpow.pop %v1604
    %v1606 = vmul.f32 %v1603, 1.442695
    %v1607 = vpow.pop %v1606
    %v1608 = vsel %vm574, %v1605, 0.0
    %1609 = vadd.xlane.f32.xlu0 %v1608
    %v1610 = vpop.xlane.xlu0 %1609
    %v1611 = vsel %vm574, %v1607, 0.0
    %1612 = vadd.xlane.f32.xlu0 %v1611
    %v1613 = vpop.xlane.xlu0 %1612
    %v1614 = vrcp.pop %v1610
    %v1615 = vrcp.pop %v1613
    %v1616 = vmul.f32 %v1605, %v1614
    %v1617 = vmul.f32 %v1607, %v1615
    %v1618 = vpack.c.bf16 %v1617, %v1616
    %1619 = vrot.lane.b32.xlu0 %v483, 16
    %v1620 = vpop.permute.xlu0 %1619
    %v1622 = vsel %vm574, %v1618, 0
    %v1625 = vsel %vm603, %v1620, 0
    %1627 = vmatprep.subr.bf16.mxu0 0
    %1628 = vmatpush1.bf16.msra.mxu0 0
    %1629 = vmatprep.subr.bf16.mxu0 0
    %1630 = vmatpush1.bf16.msra.mxu0 0
    %1631 = vmatprep.subr.bf16.mxu0 0
    %1632 = vmatpush1.bf16.msra.mxu0 0
    %1633 = vmatprep.subr.bf16.mxu0 0
    %1634 = vmatpush1.bf16.msra.mxu0 0
    %1635 = vmatprep.subr.bf16.mxu0 0
    %1636 = vmatpush1.bf16.msra.mxu0 0
    %1637 = vmatprep.subr.bf16.mxu0 0
    %1638 = vmatpush1.bf16.msra.mxu0 0
    %1639 = vmatprep.subr.bf16.mxu0 0
    %1640 = vmatpush1.bf16.msra.mxu0 0
    %1641 = vmatprep.subr.bf16.mxu0 0
    %1642 = vmatpush1.bf16.msra.mxu0 %v1625
    %1643 = vmatprep.subr.bf16.mxu0 0
    %1644 = vmatpush2.bf16.msra.mxu0 0
    %1645 = vmatprep.subr.bf16.mxu0 0
    %1646 = vmatpush2.bf16.msra.mxu0 0
    %1647 = vmatprep.subr.bf16.mxu0 0
    %1648 = vmatpush2.bf16.msra.mxu0 0
    %1649 = vmatprep.subr.bf16.mxu0 0
    %1650 = vmatpush2.bf16.msra.mxu0 0
    %1651 = vmatprep.subr.bf16.mxu0 0
    %1652 = vmatpush2.bf16.msra.mxu0 0
    %1653 = vmatprep.subr.bf16.mxu0 0
    %1654 = vmatpush2.bf16.msra.mxu0 0
    %1655 = vmatprep.subr.bf16.mxu0 0
    %1656 = vmatpush2.bf16.msra.mxu0 0
    %1657 = vmatprep.subr.bf16.mxu0 0
    %1658 = vmatpush2.bf16.msra.mxu0 0
    %1659 = vmatprep.mubr.bf16.mxu0 0
    %1660 = vmatmul.mubr.bf16.gmra.mxu0 %v1622
    %v1661 = vpop.f32.mrf.mxu0
    %v1662 = vadd.f32 0.0, %v1661
    %v1663 = vpop.f32.mrf.mxu0
    %v1664 = vpop.f32.mrf.mxu0
    %v1665 = vadd.f32 0.0, %v1664
    %v1666 = vpop.f32.mrf.mxu0
    %1667 = vdwg.mxu0
    %v1668 = vmul.f32 %v648, %v1662
    %v1669 = vmul.f32 %v648, %v1665
    %1670 = vrot.lane.b32.xlu0 %v343, 80
    %v1671 = vpop.permute.xlu0 %1670
    %v1674 = vsel %vm455, %v1503, 0
    %1676 = vmatprep.subr.bf16.mxu0 0
    %1677 = vmatpush1.bf16.msra.mxu0 0
    %1678 = vmatprep.subr.bf16.mxu0 0
    %1679 = vmatpush1.bf16.msra.mxu0 0
    %1680 = vmatprep.subr.bf16.mxu0 0
    %1681 = vmatpush1.bf16.msra.mxu0 0
    %1682 = vmatprep.subr.bf16.mxu0 0
    %1683 = vmatpush1.bf16.msra.mxu0 0
    %1684 = vmatprep.subr.bf16.mxu0 0
    %1685 = vmatpush1.bf16.msra.mxu0 0
    %1686 = vmatprep.subr.bf16.mxu0 0
    %1687 = vmatpush1.bf16.msra.mxu0 0
    %1688 = vmatprep.subr.bf16.mxu0 0
    %1689 = vmatpush1.bf16.msra.mxu0 0
    %1690 = vmatprep.subr.bf16.mxu0 0
    %1691 = vmatpush1.bf16.msra.mxu0 %v1671
    %1692 = vmatprep.subr.bf16.mxu0 0
    %1693 = vmatpush2.bf16.msra.mxu0 0
    %1694 = vmatprep.subr.bf16.mxu0 0
    %1695 = vmatpush2.bf16.msra.mxu0 0
    %1696 = vmatprep.subr.bf16.mxu0 0
    %1697 = vmatpush2.bf16.msra.mxu0 0
    %1698 = vmatprep.subr.bf16.mxu0 0
    %1699 = vmatpush2.bf16.msra.mxu0 0
    %1700 = vmatprep.subr.bf16.mxu0 0
    %1701 = vmatpush2.bf16.msra.mxu0 0
    %1702 = vmatprep.subr.bf16.mxu0 0
    %1703 = vmatpush2.bf16.msra.mxu0 0
    %1704 = vmatprep.subr.bf16.mxu0 0
    %1705 = vmatpush2.bf16.msra.mxu0 0
    %1706 = vmatprep.subr.bf16.mxu0 0
    %1707 = vmatpush2.bf16.msra.mxu0 0
    %1708 = vmatprep.mubr.bf16.mxu0 0
    %1709 = vmatmul.mubr.bf16.gmra.mxu0 %v1674
    %v1710 = vpop.f32.mrf.mxu0
    %v1711 = vadd.f32 %v1668, %v1710
    %v1712 = vpop.f32.mrf.mxu0
    %v1713 = vpop.f32.mrf.mxu0
    %v1714 = vadd.f32 %v1669, %v1713
    %v1715 = vpop.f32.mrf.mxu0
    %1716 = vdwg.mxu0
    %1719 = vrot.lane.b32.xlu0 %v1031, 16
    %v1720 = vpop.permute.xlu0 %1719
    %1721 = vrot.lane.b32.xlu0 %v1034, 16
    %v1722 = vpop.permute.xlu0 %1721
    %1727 = vrot.lane.b32.xlu0 %v1371, 32
    %v1728 = vpop.permute.xlu0 %1727
    %1729 = vrot.lane.b32.xlu0 %v1374, 32
    %v1730 = vpop.permute.xlu0 %1729
    %1735 = vrot.lane.b32.xlu0 %v1711, 48
    %v1736 = vpop.permute.xlu0 %1735
    %1737 = vrot.lane.b32.xlu0 %v1714, 48
    %v1738 = vpop.permute.xlu0 %1737
    %v1741 = vsel %vm455, %v689, %v1720
    %v1742 = vsel %vm455, %v692, %v1722
    %vm1743 = vcmask 261120
    %v1744 = vsel %vm1743, %v1741, %v1728
    %v1745 = vsel %vm1743, %v1742, %v1730
    %vm1746 = vcmask 392192
    %v1747 = vsel %vm1746, %v1744, %v1736
    %v1748 = vsel %vm1746, %v1745, %v1738
    %v1749 = vpack.c.bf16 %v1748, %v1747
    %v1750 = vld [vmem:[#allocation6] sm:$0xf]
    %v1751 = vld [vmem:[#allocation6 + $0x4] sm:$0xf]
    %v1752 = vld [vmem:[#allocation6 + $0x8] sm:$0xf]
    %v1753 = vld [vmem:[#allocation6 + $0xc] sm:$0xf]
    %v1754 = vld [vmem:[#allocation6 + $0x10] sm:$0xf]
    %v1755 = vld [vmem:[#allocation6 + $0x14] sm:$0xf]
    %v1756 = vld [vmem:[#allocation6 + $0x18] sm:$0xf]
    %v1757 = vld [vmem:[#allocation6 + $0x1c] sm:$0xf]
    %v1766 = vunpack.c.l.b16 %v1750
    %v1767 = vunpack.c.l.b16 %v1751
    %v1768 = vunpack.c.l.b16 %v1752
    %v1769 = vunpack.c.l.b16 %v1753
    %v1770 = vunpack.c.l.b16 %v1754
    %v1771 = vunpack.c.l.b16 %v1755
    %v1772 = vunpack.c.l.b16 %v1756
    %v1773 = vunpack.c.l.b16 %v1757
    %v1774 = vpack.c.b16 %v1767, %v1766
    %v1775 = vpack.c.b16 %v1769, %v1768
    %v1776 = vpack.c.b16 %v1771, %v1770
    %v1777 = vpack.c.b16 %v1773, %v1772
    %v1783 = vsel %vm119, %v1749, 0
    %1785 = vmatprep.subr.bf16.mxu0 0
    %1786 = vmatpush1.bf16.msra.mxu0 0
    %1787 = vmatprep.subr.bf16.mxu0 0
    %1788 = vmatpush1.bf16.msra.mxu0 0
    %1789 = vmatprep.subr.bf16.mxu0 0
    %1790 = vmatpush1.bf16.msra.mxu0 0
    %1791 = vmatprep.subr.bf16.mxu0 0
    %1792 = vmatpush1.bf16.msra.mxu0 0
    %1793 = vmatprep.subr.bf16.mxu0 0
    %1794 = vmatpush1.bf16.msra.mxu0 %v1777
    %1795 = vmatprep.subr.bf16.mxu0 0
    %1796 = vmatpush1.bf16.msra.mxu0 %v1776
    %1797 = vmatprep.subr.bf16.mxu0 0
    %1798 = vmatpush1.bf16.msra.mxu0 %v1775
    %1799 = vmatprep.subr.bf16.mxu0 0
    %1800 = vmatpush1.bf16.msra.mxu0 %v1774
    %1801 = vmatprep.subr.bf16.mxu0 0
    %1802 = vmatpush2.bf16.msra.mxu0 0
    %1803 = vmatprep.subr.bf16.mxu0 0
    %1804 = vmatpush2.bf16.msra.mxu0 0
    %1805 = vmatprep.subr.bf16.mxu0 0
    %1806 = vmatpush2.bf16.msra.mxu0 0
    %1807 = vmatprep.subr.bf16.mxu0 0
    %1808 = vmatpush2.bf16.msra.mxu0 0
    %1809 = vmatprep.subr.bf16.mxu0 0
    %1810 = vmatpush2.bf16.msra.mxu0 0
    %1811 = vmatprep.subr.bf16.mxu0 0
    %1812 = vmatpush2.bf16.msra.mxu0 0
    %1813 = vmatprep.subr.bf16.mxu0 0
    %1814 = vmatpush2.bf16.msra.mxu0 0
    %1815 = vmatprep.subr.bf16.mxu0 0
    %1816 = vmatpush2.bf16.msra.mxu0 0
    %1817 = vmatprep.mubr.bf16.mxu0 0
    %1818 = vmatmul.mubr.bf16.gmra.mxu0 %v1783
    %v1819 = vpop.f32.mrf.mxu0
    %v1820 = vadd.f32 0.0, %v1819
    %v1821 = vpop.f32.mrf.mxu0
    %v1822 = vpop.f32.mrf.mxu0
    %v1823 = vadd.f32 0.0, %v1822
    %v1824 = vpop.f32.mrf.mxu0
    %1825 = vdwg.mxu0
    %v1826 = vadd.f32 %v115, %v1820
    %v1827 = vadd.f32 %v116, %v1823
    %v1828 = vmul.f32 %v1826, %v1826
    %v1829 = vmul.f32 %v1827, %v1827
    %v1830 = vsel %vm119, %v1828, 0.0
    %1831 = vadd.xlane.f32.xlu0 %v1830
    %v1832 = vpop.xlane.xlu0 %1831
    %v1833 = vsel %vm119, %v1829, 0.0
    %1834 = vadd.xlane.f32.xlu0 %v1833
    %v1835 = vpop.xlane.xlu0 %1834
    %v1836 = vmul.f32 %v1832, %v126
    %v1837 = vmul.f32 %v1835, %v126
    %v1838 = vadd.f32 %v1836, 1e-05
    %v1839 = vadd.f32 %v1837, 1e-05
    %v1840 = vrsqrt.pop %v1838
    %v1841 = vrsqrt.pop %v1839
    %v1842 = vmul.f32 %v1826, %v1840
    %v1843 = vmul.f32 %v1827, %v1841
    %v1844 = vld [vmem:[%s3] sm:$0x1]
    %v1846 = vlaneseq
    %v1847 = vshrl.u32 %v1846, 7
    %v1848 = vsub.s32 0, %v1847
    %v1849 = vrot.slane %v1844, %v1848
    %v1851 = vmul.f32 %v1842, %v1849
    %v1852 = vmul.f32 %v1843, %v1849
    %v1853 = vpack.c.bf16 %v1852, %v1851
    %v1854 = vld [vmem:[%s10] sm:$0xff]
    %v1855 = vld [vmem:[%s10 + $0x8] sm:$0xff]
    %v1856 = vld [vmem:[%s10 + $0x10] sm:$0xff]
    %v1857 = vld [vmem:[%s10 + $0x18] sm:$0xff]
    %v1858 = vld [vmem:[%s10 + $0x20] sm:$0xff]
    %v1859 = vld [vmem:[%s10 + $0x28] sm:$0xff]
    %v1860 = vld [vmem:[%s10 + $0x30] sm:$0xff]
    %v1861 = vld [vmem:[%s10 + $0x38] sm:$0xff]
    %v1870 = vunpack.c.l.b16 %v1854
    %v1871 = vunpack.c.h.b16 %v1854
    %v1872 = vunpack.c.l.b16 %v1855
    %v1873 = vunpack.c.h.b16 %v1855
    %v1874 = vunpack.c.l.b16 %v1856
    %v1875 = vunpack.c.h.b16 %v1856
    %v1876 = vunpack.c.l.b16 %v1857
    %v1877 = vunpack.c.h.b16 %v1857
    %v1878 = vunpack.c.l.b16 %v1858
    %v1879 = vunpack.c.h.b16 %v1858
    %v1880 = vunpack.c.l.b16 %v1859
    %v1881 = vunpack.c.h.b16 %v1859
    %v1882 = vunpack.c.l.b16 %v1860
    %v1883 = vunpack.c.h.b16 %v1860
    %v1884 = vunpack.c.l.b16 %v1861
    %v1885 = vunpack.c.h.b16 %v1861
    %v1886 = vpack.c.b16 %v1872, %v1870
    %v1887 = vpack.c.b16 %v1873, %v1871
    %v1888 = vpack.c.b16 %v1876, %v1874
    %v1889 = vpack.c.b16 %v1877, %v1875
    %v1890 = vpack.c.b16 %v1880, %v1878
    %v1891 = vpack.c.b16 %v1881, %v1879
    %v1892 = vpack.c.b16 %v1884, %v1882
    %v1893 = vpack.c.b16 %v1885, %v1883
    %v1903 = vsel %vm119, %v1853, 0
    %1905 = vmatprep.subr.bf16.mxu0 0
    %1906 = vmatpush1.bf16.msra.mxu0 0
    %1907 = vmatprep.subr.bf16.mxu0 0
    %1908 = vmatpush1.bf16.msra.mxu0 0
    %1909 = vmatprep.subr.bf16.mxu0 0
    %1910 = vmatpush1.bf16.msra.mxu0 0
    %1911 = vmatprep.subr.bf16.mxu0 0
    %1912 = vmatpush1.bf16.msra.mxu0 0
    %1913 = vmatprep.subr.bf16.mxu0 %v1893
    %1914 = vmatpush1.bf16.msra.mxu0 %v1892
    %1915 = vmatprep.subr.bf16.mxu0 %v1891
    %1916 = vmatpush1.bf16.msra.mxu0 %v1890
    %1917 = vmatprep.subr.bf16.mxu0 %v1889
    %1918 = vmatpush1.bf16.msra.mxu0 %v1888
    %1919 = vmatprep.subr.bf16.mxu0 %v1887
    %1920 = vmatpush1.bf16.msra.mxu0 %v1886
    %1921 = vmatprep.subr.bf16.mxu0 0
    %1922 = vmatpush2.bf16.msra.mxu0 0
    %1923 = vmatprep.subr.bf16.mxu0 0
    %1924 = vmatpush2.bf16.msra.mxu0 0
    %1925 = vmatprep.subr.bf16.mxu0 0
    %1926 = vmatpush2.bf16.msra.mxu0 0
    %1927 = vmatprep.subr.bf16.mxu0 0
    %1928 = vmatpush2.bf16.msra.mxu0 0
    %1929 = vmatprep.subr.bf16.mxu0 0
    %1930 = vmatpush2.bf16.msra.mxu0 0
    %1931 = vmatprep.subr.bf16.mxu0 0
    %1932 = vmatpush2.bf16.msra.mxu0 0
    %1933 = vmatprep.subr.bf16.mxu0 0
    %1934 = vmatpush2.bf16.msra.mxu0 0
    %1935 = vmatprep.subr.bf16.mxu0 0
    %1936 = vmatpush2.bf16.msra.mxu0 0
    %1937 = vmatprep.mubr.bf16.mxu0 0
    %1938 = vmatmul.mubr.bf16.gmra.mxu0 %v1903
    %v1939 = vpop.f32.mrf.mxu0
    %v1940 = vadd.f32 0.0, %v1939
    %v1941 = vpop.f32.mrf.mxu0
    %v1942 = vadd.f32 0.0, %v1941
    %v1943 = vpop.f32.mrf.mxu0
    %v1944 = vadd.f32 0.0, %v1943
    %v1945 = vpop.f32.mrf.mxu0
    %v1946 = vadd.f32 0.0, %v1945
    %1947 = vdwg.mxu0
    %v1948 = vld [vmem:[%s11] sm:$0xff]
    %v1949 = vld [vmem:[%s11 + $0x8] sm:$0xff]
    %v1950 = vld [vmem:[%s11 + $0x10] sm:$0xff]
    %v1951 = vld [vmem:[%s11 + $0x18] sm:$0xff]
    %v1952 = vld [vmem:[%s11 + $0x20] sm:$0xff]
    %v1953 = vld [vmem:[%s11 + $0x28] sm:$0xff]
    %v1954 = vld [vmem:[%s11 + $0x30] sm:$0xff]
    %v1955 = vld [vmem:[%s11 + $0x38] sm:$0xff]
    %v1964 = vunpack.c.l.b16 %v1948
    %v1965 = vunpack.c.h.b16 %v1948
    %v1966 = vunpack.c.l.b16 %v1949
    %v1967 = vunpack.c.h.b16 %v1949
    %v1968 = vunpack.c.l.b16 %v1950
    %v1969 = vunpack.c.h.b16 %v1950
    %v1970 = vunpack.c.l.b16 %v1951
    %v1971 = vunpack.c.h.b16 %v1951
    %v1972 = vunpack.c.l.b16 %v1952
    %v1973 = vunpack.c.h.b16 %v1952
    %v1974 = vunpack.c.l.b16 %v1953
    %v1975 = vunpack.c.h.b16 %v1953
    %v1976 = vunpack.c.l.b16 %v1954
    %v1977 = vunpack.c.h.b16 %v1954
    %v1978 = vunpack.c.l.b16 %v1955
    %v1979 = vunpack.c.h.b16 %v1955
    %v1980 = vpack.c.b16 %v1966, %v1964
    %v1981 = vpack.c.b16 %v1967, %v1965
    %v1982 = vpack.c.b16 %v1970, %v1968
    %v1983 = vpack.c.b16 %v1971, %v1969
    %v1984 = vpack.c.b16 %v1974, %v1972
    %v1985 = vpack.c.b16 %v1975, %v1973
    %v1986 = vpack.c.b16 %v1978, %v1976
    %v1987 = vpack.c.b16 %v1979, %v1977
    %1996 = vmatprep.subr.bf16.mxu0 0
    %1997 = vmatpush1.bf16.msra.mxu0 0
    %1998 = vmatprep.subr.bf16.mxu0 0
    %1999 = vmatpush1.bf16.msra.mxu0 0
    %2000 = vmatprep.subr.bf16.mxu0 0
    %2001 = vmatpush1.bf16.msra.mxu0 0
    %2002 = vmatprep.subr.bf16.mxu0 0
    %2003 = vmatpush1.bf16.msra.mxu0 0
    %2004 = vmatprep.subr.bf16.mxu0 %v1987
    %2005 = vmatpush1.bf16.msra.mxu0 %v1986
    %2006 = vmatprep.subr.bf16.mxu0 %v1985
    %2007 = vmatpush1.bf16.msra.mxu0 %v1984
    %2008 = vmatprep.subr.bf16.mxu0 %v1983
    %2009 = vmatpush1.bf16.msra.mxu0 %v1982
    %2010 = vmatprep.subr.bf16.mxu0 %v1981
    %2011 = vmatpush1.bf16.msra.mxu0 %v1980
    %2012 = vmatprep.subr.bf16.mxu0 0
    %2013 = vmatpush2.bf16.msra.mxu0 0
    %2014 = vmatprep.subr.bf16.mxu0 0
    %2015 = vmatpush2.bf16.msra.mxu0 0
    %2016 = vmatprep.subr.bf16.mxu0 0
    %2017 = vmatpush2.bf16.msra.mxu0 0
    %2018 = vmatprep.subr.bf16.mxu0 0
    %2019 = vmatpush2.bf16.msra.mxu0 0
    %2020 = vmatprep.subr.bf16.mxu0 0
    %2021 = vmatpush2.bf16.msra.mxu0 0
    %2022 = vmatprep.subr.bf16.mxu0 0
    %2023 = vmatpush2.bf16.msra.mxu0 0
    %2024 = vmatprep.subr.bf16.mxu0 0
    %2025 = vmatpush2.bf16.msra.mxu0 0
    %2026 = vmatprep.subr.bf16.mxu0 0
    %2027 = vmatpush2.bf16.msra.mxu0 0
    %2028 = vmatprep.mubr.bf16.mxu0 0
    %2029 = vmatmul.mubr.bf16.gmra.mxu0 %v1903
    %v2030 = vpop.f32.mrf.mxu0
    %v2031 = vadd.f32 0.0, %v2030
    %v2032 = vpop.f32.mrf.mxu0
    %v2033 = vadd.f32 0.0, %v2032
    %v2034 = vpop.f32.mrf.mxu0
    %v2035 = vadd.f32 0.0, %v2034
    %v2036 = vpop.f32.mrf.mxu0
    %v2037 = vadd.f32 0.0, %v2036
    %2038 = vdwg.mxu0
    %v2039 = vxor.u32 %v1940, 2147483648
    %v2040 = vxor.u32 %v1942, 2147483648
    %v2041 = vxor.u32 %v1944, 2147483648
    %v2042 = vxor.u32 %v1946, 2147483648
    %v2043 = vmul.f32 %v2039, 1.442695
    %v2044 = vpow.pop %v2043
    %v2045 = vmul.f32 %v2040, 1.442695
    %v2046 = vpow.pop %v2045
    %v2047 = vmul.f32 %v2041, 1.442695
    %v2048 = vpow.pop %v2047
    %v2049 = vmul.f32 %v2042, 1.442695
    %v2050 = vpow.pop %v2049
    %v2051 = vadd.f32 %v2044, 1.0
    %v2052 = vadd.f32 %v2046, 1.0
    %v2053 = vadd.f32 %v2048, 1.0
    %v2054 = vadd.f32 %v2050, 1.0
    %v2055 = vrcp.pop %v2051
    %v2056 = vmul.f32 1.0, %v2055
    %v2057 = vrcp.pop %v2052
    %v2058 = vmul.f32 1.0, %v2057
    %v2059 = vrcp.pop %v2053
    %v2060 = vmul.f32 1.0, %v2059
    %v2061 = vrcp.pop %v2054
    %v2062 = vmul.f32 1.0, %v2061
    %v2063 = vmul.f32 %v1940, %v2056
    %v2064 = vmul.f32 %v1942, %v2058
    %v2065 = vmul.f32 %v1944, %v2060
    %v2066 = vmul.f32 %v1946, %v2062
    %v2067 = vmul.f32 %v2063, %v2031
    %v2068 = vmul.f32 %v2064, %v2033
    %v2069 = vmul.f32 %v2065, %v2035
    %v2070 = vmul.f32 %v2066, %v2037
    %v2071 = vpack.c.bf16 %v2069, %v2067
    %v2072 = vpack.c.bf16 %v2070, %v2068
    %v2073 = vld [vmem:[%s12] sm:$0xf]
    %v2074 = vld [vmem:[%s12 + $0x4] sm:$0xf]
    %v2075 = vld [vmem:[%s12 + $0x8] sm:$0xf]
    %v2076 = vld [vmem:[%s12 + $0xc] sm:$0xf]
    %v2077 = vld [vmem:[%s12 + $0x10] sm:$0xf]
    %v2078 = vld [vmem:[%s12 + $0x14] sm:$0xf]
    %v2079 = vld [vmem:[%s12 + $0x18] sm:$0xf]
    %v2080 = vld [vmem:[%s12 + $0x1c] sm:$0xf]
    %v2081 = vld [vmem:[%s12 + $0x20] sm:$0xf]
    %v2082 = vld [vmem:[%s12 + $0x24] sm:$0xf]
    %v2083 = vld [vmem:[%s12 + $0x28] sm:$0xf]
    %v2084 = vld [vmem:[%s12 + $0x2c] sm:$0xf]
    %v2085 = vld [vmem:[%s12 + $0x30] sm:$0xf]
    %v2086 = vld [vmem:[%s12 + $0x34] sm:$0xf]
    %v2087 = vld [vmem:[%s12 + $0x38] sm:$0xf]
    %v2088 = vld [vmem:[%s12 + $0x3c] sm:$0xf]
    %v2089 = vld [vmem:[%s12 + $0x40] sm:$0xf]
    %v2090 = vld [vmem:[%s12 + $0x44] sm:$0xf]
    %v2091 = vld [vmem:[%s12 + $0x48] sm:$0xf]
    %v2092 = vld [vmem:[%s12 + $0x4c] sm:$0xf]
    %v2093 = vld [vmem:[%s12 + $0x50] sm:$0xf]
    %v2094 = vld [vmem:[%s12 + $0x54] sm:$0xf]
    %v2095 = vld [vmem:[%s12 + $0x58] sm:$0xf]
    %v2096 = vld [vmem:[%s12 + $0x5c] sm:$0xf]
    %v2097 = vld [vmem:[%s12 + $0x60] sm:$0xf]
    %v2098 = vld [vmem:[%s12 + $0x64] sm:$0xf]
    %v2099 = vld [vmem:[%s12 + $0x68] sm:$0xf]
    %v2100 = vld [vmem:[%s12 + $0x6c] sm:$0xf]
    %v2101 = vld [vmem:[%s12 + $0x70] sm:$0xf]
    %v2102 = vld [vmem:[%s12 + $0x74] sm:$0xf]
    %v2103 = vld [vmem:[%s12 + $0x78] sm:$0xf]
    %v2104 = vld [vmem:[%s12 + $0x7c] sm:$0xf]
    %v2137 = vunpack.c.l.b16 %v2073
    %v2138 = vunpack.c.l.b16 %v2074
    %v2139 = vunpack.c.l.b16 %v2075
    %v2140 = vunpack.c.l.b16 %v2076
    %v2141 = vunpack.c.l.b16 %v2077
    %v2142 = vunpack.c.l.b16 %v2078
    %v2143 = vunpack.c.l.b16 %v2079
    %v2144 = vunpack.c.l.b16 %v2080
    %v2145 = vunpack.c.l.b16 %v2081
    %v2146 = vunpack.c.l.b16 %v2082
    %v2147 = vunpack.c.l.b16 %v2083
    %v2148 = vunpack.c.l.b16 %v2084
    %v2149 = vunpack.c.l.b16 %v2085
    %v2150 = vunpack.c.l.b16 %v2086
    %v2151 = vunpack.c.l.b16 %v2087
    %v2152 = vunpack.c.l.b16 %v2088
    %v2153 = vunpack.c.l.b16 %v2089
    %v2154 = vunpack.c.l.b16 %v2090
    %v2155 = vunpack.c.l.b16 %v2091
    %v2156 = vunpack.c.l.b16 %v2092
    %v2157 = vunpack.c.l.b16 %v2093
    %v2158 = vunpack.c.l.b16 %v2094
    %v2159 = vunpack.c.l.b16 %v2095
    %v2160 = vunpack.c.l.b16 %v2096
    %v2161 = vunpack.c.l.b16 %v2097
    %v2162 = vunpack.c.l.b16 %v2098
    %v2163 = vunpack.c.l.b16 %v2099
    %v2164 = vunpack.c.l.b16 %v2100
    %v2165 = vunpack.c.l.b16 %v2101
    %v2166 = vunpack.c.l.b16 %v2102
    %v2167 = vunpack.c.l.b16 %v2103
    %v2168 = vunpack.c.l.b16 %v2104
    %v2169 = vpack.c.b16 %v2138, %v2137
    %v2170 = vpack.c.b16 %v2140, %v2139
    %v2171 = vpack.c.b16 %v2142, %v2141
    %v2172 = vpack.c.b16 %v2144, %v2143
    %v2173 = vpack.c.b16 %v2146, %v2145
    %v2174 = vpack.c.b16 %v2148, %v2147
    %v2175 = vpack.c.b16 %v2150, %v2149
    %v2176 = vpack.c.b16 %v2152, %v2151
    %v2177 = vpack.c.b16 %v2154, %v2153
    %v2178 = vpack.c.b16 %v2156, %v2155
    %v2179 = vpack.c.b16 %v2158, %v2157
    %v2180 = vpack.c.b16 %v2160, %v2159
    %v2181 = vpack.c.b16 %v2162, %v2161
    %v2182 = vpack.c.b16 %v2164, %v2163
    %v2183 = vpack.c.b16 %v2166, %v2165
    %v2184 = vpack.c.b16 %v2168, %v2167
    %2201 = vmatprep.subr.bf16.mxu0 0
    %2202 = vmatpush1.bf16.msra.mxu0 %v2176
    %2203 = vmatprep.subr.bf16.mxu0 0
    %2204 = vmatpush1.bf16.msra.mxu0 %v2175
    %2205 = vmatprep.subr.bf16.mxu0 0
    %2206 = vmatpush1.bf16.msra.mxu0 %v2174
    %2207 = vmatprep.subr.bf16.mxu0 0
    %2208 = vmatpush1.bf16.msra.mxu0 %v2173
    %2209 = vmatprep.subr.bf16.mxu0 0
    %2210 = vmatpush1.bf16.msra.mxu0 %v2172
    %2211 = vmatprep.subr.bf16.mxu0 0
    %2212 = vmatpush1.bf16.msra.mxu0 %v2171
    %2213 = vmatprep.subr.bf16.mxu0 0
    %2214 = vmatpush1.bf16.msra.mxu0 %v2170
    %2215 = vmatprep.subr.bf16.mxu0 0
    %2216 = vmatpush1.bf16.msra.mxu0 %v2169
    %2217 = vmatprep.subr.bf16.mxu0 0
    %2218 = vmatpush2.bf16.msra.mxu0 %v2184
    %2219 = vmatprep.subr.bf16.mxu0 0
    %2220 = vmatpush2.bf16.msra.mxu0 %v2183
    %2221 = vmatprep.subr.bf16.mxu0 0
    %2222 = vmatpush2.bf16.msra.mxu0 %v2182
    %2223 = vmatprep.subr.bf16.mxu0 0
    %2224 = vmatpush2.bf16.msra.mxu0 %v2181
    %2225 = vmatprep.subr.bf16.mxu0 0
    %2226 = vmatpush2.bf16.msra.mxu0 %v2180
    %2227 = vmatprep.subr.bf16.mxu0 0
    %2228 = vmatpush2.bf16.msra.mxu0 %v2179
    %2229 = vmatprep.subr.bf16.mxu0 0
    %2230 = vmatpush2.bf16.msra.mxu0 %v2178
    %2231 = vmatprep.subr.bf16.mxu0 0
    %2232 = vmatpush2.bf16.msra.mxu0 %v2177
    %2233 = vmatprep.mubr.bf16.mxu0 %v2072
    %2234 = vmatmul.mubr.bf16.gmra.mxu0 %v2071
    %v2235 = vpop.f32.mrf.mxu0
    %v2236 = vadd.f32 0.0, %v2235
    %v2237 = vpop.f32.mrf.mxu0
    %v2238 = vpop.f32.mrf.mxu0
    %v2239 = vadd.f32 0.0, %v2238
    %v2240 = vpop.f32.mrf.mxu0
    %2241 = vdwg.mxu0
    %v2242 = vadd.f32 %v1826, %v2236
    %v2243 = vadd.f32 %v1827, %v2239
    %2244 = vst.msk [vmem:[#allocation12] sm:$0xff] %vm119, %v2242
    %2245 = vst.msk [vmem:[#allocation12 + $0x8] sm:$0xff] %vm119, %v2243
    // Predicated region
    $region74: #{tpu_custom_call.1} parent=1 // pred_check
      _
    $region75: #{tpu_custom_call.1} parent=1 // pred_check_branch
      %2247 = sbr.rel (0) target = $region77
    $region76: #{tpu_custom_call.1} parent=1 // pred_region
      %s2249 = ssub.s32 256, 256
      %2250 = vsyncadd [#allocation5], %s2249
      %s2251 = sshll.u32 [#allocation12], 4
      %s2252 = int_to_ptr.vmem [resolvable:$true] %s2251
      %2257 = dma.vmem_to_hbm [thread:$0]  %s2252, 256, %s13, [#allocation5], 128, 128, 8
    $region77: #{tpu_custom_call.1} parent=1 // pred_fallthru
      _
    // Predicated region
    $region78: #{tpu_custom_call.1} parent=1 // pred_check
      _
    $region79: #{tpu_custom_call.1} parent=1 // pred_check_branch
      %2259 = sbr.rel (0) target = $region81
    $region80: #{tpu_custom_call.1} parent=1 // pred_region
      %2260 = dma.done [#allocation5], 256
    $region81: #{tpu_custom_call.1} parent=1 // pred_fallthru
      _
    %2261 = vsyncpa [#allocation4], 1
    %2262 = vsyncpa [#allocation7], 1
    %2263 = vsyncpa [#allocation10], 1
    %2264 = vsyncpa [#allocation5], 1

</llo_original>
